<compile_context>
chip_gen: v5e
topology: v5e:2x2
jax: 0.10.0
libtpu: 0.0.40
codegen_flags: <defaults>
</compile_context>

<pallas_src>
import functools
import math

import jax
import jax.numpy as jnp
from jax.experimental import pallas as pl
from jax.experimental.pallas import tpu as pltpu


def _round_up(x, m):
    return ((x + m - 1) // m) * m


def _make_selector_kernel(num_heads, head_dim, inv_norm):
    nh, dh = num_heads, head_dim

    def kernel(imp_ref, coarse_ref, imask_ref, negm_ref,
               wq_ref, bq_ref, wk_ref, bk_ref, out_ref, k_scratch):
        # Per grid step (b, i):
        #   imp_ref    : (BB, TI, H)    bf16   query-token tile
        #   coarse_ref : (BB, NBp, H)   bf16   keys (resident across i)
        #   imask_ref  : (BB, TI, 1)    f32    importance mask column
        #   negm_ref   : (BB, 1, NBp)   f32    additive key mask row
        #   wq/wk      : (H, H)         bf16   flat x@W weights (1/sqrt(dh)
        #                                      pre-folded into wq/bq); resident
        #   bq/bk      : (1, H)         f32
        #   out_ref    : (BB, 1, NBp)   f32    avg-prob accumulator across i
        #   k_scratch  : (BB, NBp, H)   bf16   K projection (computed at i==0)
        i = pl.program_id(1)
        BB, TI, H = imp_ref.shape
        NBp = coarse_ref.shape[1]

        @pl.when(i == 0)
        def _():
            out_ref[...] = jnp.zeros_like(out_ref)
            # K projection once per batch tile: one (BB*NBp, H) @ (H, H) pass.
            xk = coarse_ref[...].reshape(BB * NBp, H)
            kf = jnp.dot(xk, wk_ref[...],
                         preferred_element_type=jnp.float32) + bk_ref[...]
            k_scratch[...] = kf.reshape(BB, NBp, nh * dh).astype(jnp.bfloat16)

        # Q projection for this query tile: one (BB*TI, H) @ (H, H) pass.
        xq = imp_ref[...].reshape(BB * TI, H)
        qf = jnp.dot(xq, wq_ref[...],
                     preferred_element_type=jnp.float32) + bq_ref[...]
        qf = qf.reshape(BB, TI, nh * dh).astype(jnp.bfloat16)

        # Per (batch, head): (TI, dh) x (NBp, dh)^T scores, masked softmax over
        # keys, and the fused imask/(nh*NI)/denom-weighted key-axis reduction.
        for b in range(BB):                      # static unroll, BB <= 4
            q_b = qf[b]                          # (TI, H)   bf16
            k_b = k_scratch[b]                   # (NBp, H)  bf16
            negm = negm_ref[b]                   # (1, NBp)  f32
            w_row = imask_ref[b] * inv_norm      # (TI, 1)   f32
            acc = jnp.zeros((1, NBp), jnp.float32)
            for h in range(nh):                  # static unroll over heads
                qh = q_b[:, h * dh:(h + 1) * dh]           # (TI, dh)
                kh = k_b[:, h * dh:(h + 1) * dh]           # (NBp, dh)
                s = jax.lax.dot_general(qh, kh, (((1,), (1,)), ((), ())),
                                        preferred_element_type=jnp.float32)
                s = s + negm
                s = s - jnp.max(s, axis=-1, keepdims=True)
                e = jnp.exp(s)
                denom = jnp.sum(e, axis=-1, keepdims=True)
                # exact reciprocal: denom is only (TI, 1), negligible cost, and
                # avoids rank flips in near-ties vs. the reference softmax.
                row_scale = w_row * pl.reciprocal(denom, approx=False)
                acc = acc + jnp.sum(e * row_scale, axis=0, keepdims=True)
            out_ref[b] = out_ref[b] + acc

    return kernel


def selector_forward(mixed_states, params, *, num_fine_blocks, num_heads):
    imp = mixed_states['important_token_states']       # (B, NI, H)
    imask = mixed_states['importance_mask']            # (B, NI)
    coarse = mixed_states['coarse_token_states']       # (B, NB, H)
    cmask = mixed_states['coarse_token_mask']          # (B, NB)

    B, NI, H = imp.shape
    NB = coarse.shape[1]
    assert num_fine_blocks <= NB
    assert H % num_heads == 0
    dh = H // num_heads

    # --- tiling ---------------------------------------------------------
    NBp = _round_up(NB, 128)                  # lane-dense key axis
    TI = min(128, _round_up(NI, 8))           # query tile (multiple of 8)
    NIp = _round_up(NI, TI)
    BB = next(c for c in (4, 3, 2, 1) if B % c == 0)   # batch tile (bounded unroll)
    grid = (B // BB, NIp // TI)

    # --- operand plumbing (cast before pad; all relayout done here) ------
    imp_bf = jnp.pad(imp.astype(jnp.bfloat16),
                     ((0, 0), (0, NIp - NI), (0, 0)))
    coarse_bf = jnp.pad(coarse.astype(jnp.bfloat16),
                        ((0, 0), (0, NBp - NB), (0, 0)))
    imask_col = jnp.pad(imask.astype(jnp.float32),
                        ((0, 0), (0, NIp - NI))).reshape(B, NIp, 1)
    cmask_p = jnp.pad(cmask.astype(jnp.float32), ((0, 0), (0, NBp - NB)))
    neg_mask = ((1.0 - cmask_p) * (-1e9)).reshape(B, 1, NBp)

    # Flat x @ W weights (output columns head-major, matching .view(nh, dh)).
    # Fold the 1/sqrt(dh) attention scale into Wq/bq here.
    scale = 1.0 / math.sqrt(dh)
    wq_flat = (params['wq'] * scale).astype(jnp.bfloat16)          # (H, H)
    bq_flat = (params['bq'].reshape(1, H) * scale).astype(jnp.float32)
    wk_flat = params['wk'].astype(jnp.bfloat16)                    # (H, H)
    bk_flat = params['bk'].reshape(1, H).astype(jnp.float32)

    # avg[b, j] = sum_{h,i} probs[b,h,i,j] * imask[b,i] / (nh * NI)
    inv_norm = 1.0 / float(num_heads * NI)

    kernel = _make_selector_kernel(num_heads, dh, inv_norm)

    flops = (2 * B * NIp * H * H + 2 * B * NBp * H * H            # projections
             + 2 * B * num_heads * NIp * NBp * dh                 # QK^T
             + 4 * B * num_heads * NIp * NBp)                     # epilogue
    bytes_accessed = (imp_bf.size * 2 + coarse_bf.size * 2 + imask_col.size * 4
                      + neg_mask.size * 4 + 2 * (H * H * 2 + H * 4)
                      + B * NBp * 4)
    cost = pl.CostEstimate(flops=flops,
                           transcendentals=B * num_heads * NIp * NBp,
                           bytes_accessed=bytes_accessed)

    # Explicit VMEM budget: double-buffered activation tiles + resident
    # weights + K scratch + per-head (TI, NBp) score/exp temporaries.
    vmem_est = (2 * (BB * TI * H * 2)                 # imp tiles (bf16, x2 bufs)
                + 2 * (BB * NBp * H * 2)              # coarse tiles
                + 2 * (BB * max(TI, 8) * 128 * 4)     # imask (lane padded)
                + 4 * (BB * 8 * NBp * 4)              # neg mask + output blocks
                + 2 * 2 * (H * H * 2 + 8 * H * 4)     # wq/wk + biases (x2 bufs)
                + BB * NBp * H * 2                    # K projection scratch
                + 6 * (TI * NBp * 4))                 # in-kernel score/exp temps
    vmem_limit = int(min(64 * 1024 * 1024, max(8 * 1024 * 1024, 2 * vmem_est)))

    avg_p = pl.pallas_call(
        kernel,
        out_shape=jax.ShapeDtypeStruct((B, 1, NBp), jnp.float32),
        grid=grid,
        in_specs=[
            pl.BlockSpec((BB, TI, H), lambda b, i: (b, i, 0)),
            pl.BlockSpec((BB, NBp, H), lambda b, i: (b, 0, 0)),
            pl.BlockSpec((BB, TI, 1), lambda b, i: (b, i, 0)),
            pl.BlockSpec((BB, 1, NBp), lambda b, i: (b, 0, 0)),
            # TODO(synk): on v7x (64 MiB VMEM) mark these constant-index
            # weight/bias specs single-buffered (pipeline_mode=pl.Buffered(1))
            # to reclaim the redundant second buffer.
            pl.BlockSpec((H, H), lambda b, i: (0, 0)),
            pl.BlockSpec((1, H), lambda b, i: (0, 0)),
            pl.BlockSpec((H, H), lambda b, i: (0, 0)),
            pl.BlockSpec((1, H), lambda b, i: (0, 0)),
        ],
        out_specs=pl.BlockSpec((BB, 1, NBp), lambda b, i: (b, 0, 0)),
        scratch_shapes=[pltpu.VMEM((BB, NBp, H), jnp.bfloat16)],
        compiler_params=pltpu.CompilerParams(
            dimension_semantics=("parallel", "arbitrary"),
            vmem_limit_bytes=vmem_limit),
        cost_estimate=cost,
    )(imp_bf, coarse_bf, imask_col, neg_mask,
      wq_flat, bq_flat, wk_flat, bk_flat)

    avg_probs = avg_p[:, 0, :NB]                      # drop lane padding

    # average_prob_logits = log(probs.mean(dim=1) + 1e-5)
    logits = jnp.log(avg_probs + 1e-5)

    # Eval (self.training == False) path: descending argsort of the logits.
    # TODO(synk): training-time exploration branch (random argsort mixed by
    # explore_prob) is not implemented; eval semantics only.
    block_indices = jnp.argsort(-logits, axis=1)

    probs = jax.nn.softmax(logits, axis=-1)
    probs_sorted = jnp.take_along_axis(probs, block_indices, axis=1)

    fine_idx = block_indices[:, :num_fine_blocks]
    coarse_idx = block_indices[:, num_fine_blocks:]
    fine_scores = probs_sorted[:, :num_fine_blocks]
    coarse_scores = 1.0 - probs_sorted[:, num_fine_blocks:]

    out = dict(mixed_states)
    out['fine_block_indices'] = fine_idx
    out['coarse_block_indices'] = coarse_idx
    # straight-through: value is 1, gradient flows through the score
    out['fine_block_scores'] = 1.0 + fine_scores - jax.lax.stop_gradient(fine_scores)
    out['coarse_block_scores'] = 1.0 + coarse_scores - jax.lax.stop_gradient(coarse_scores)
    return out


if __name__ == "__main__":
    # Small shapes consistent with the module's forward.
    B, NI, NB, H = 2, 8, 16, 32
    NUM_HEADS = 4
    NUM_FINE_BLOCKS = 4

    key = jax.random.PRNGKey(0)
    k1, k2, k3, k4, k5, k6 = jax.random.split(key, 6)

    important_token_states = jax.random.normal(k1, (B, NI, H), jnp.float32)
    coarse_token_states = jax.random.normal(k2, (B, NB, H), jnp.float32)

    importance_mask = jnp.ones((B, NI), jnp.float32).at[1, NI - 1].set(0.0)
    coarse_token_mask = jnp.ones((B, NB), jnp.float32).at[1, NB - 2:].set(0.0)

    # Deterministic attention parameters (Q/K projections of the submodule),
    # stored as x @ W (input-dim first), output columns head-major.
    params = {
        'wq': jax.random.normal(k3, (H, H), jnp.float32) / math.sqrt(H),
        'bq': jax.random.normal(k4, (1, H), jnp.float32) * 0.02,
        'wk': jax.random.normal(k5, (H, H), jnp.float32) / math.sqrt(H),
        'bk': jax.random.normal(k6, (1, H), jnp.float32) * 0.02,
    }

    mixed_states = {
        'important_token_states': important_token_states,
        'importance_mask': importance_mask,
        'coarse_token_states': coarse_token_states,
        'coarse_token_mask': coarse_token_mask,
    }

    out = selector_forward(mixed_states, params,
                           num_fine_blocks=NUM_FINE_BLOCKS,
                           num_heads=NUM_HEADS)
    jax.block_until_ready(out['fine_block_scores'])
    jax.block_until_ready(out['fine_block_indices'])

    print("KERNEL_OK")
</pallas_src>

<mosaic_0001>
module attributes {stable_mosaic.version = 11 : i64} {
  func.func @kernel(%arg0: i32, %arg1: i32, %arg2: memref<2x8x32xbf16, #tpu.memory_space<vmem>>, %arg3: memref<2x128x32xbf16, #tpu.memory_space<vmem>>, %arg4: memref<2x8x1xf32, #tpu.memory_space<vmem>>, %arg5: memref<2x1x128xf32, #tpu.memory_space<vmem>>, %arg6: memref<32x32xbf16, #tpu.memory_space<vmem>>, %arg7: memref<1x32xf32, #tpu.memory_space<vmem>>, %arg8: memref<32x32xbf16, #tpu.memory_space<vmem>>, %arg9: memref<1x32xf32, #tpu.memory_space<vmem>>, %arg10: memref<2x1x128xf32, #tpu.memory_space<vmem>>, %arg11: memref<2x128x32xbf16, #tpu.memory_space<vmem>>) attributes {dimension_semantics = [#tpu.dimension_semantics<parallel>, #tpu.dimension_semantics<arbitrary>], iteration_bounds = array<i64: 1, 1>, scalar_prefetch = 0 : i64, scratch_operands = 1 : i64, tpu.core_type = #tpu.core_type<tc>, window_params = [{transform_indices = @transform_0, window_bounds = array<i64: 2, 8, 32>}, {transform_indices = @transform_1, window_bounds = array<i64: 2, 128, 32>}, {transform_indices = @transform_2, window_bounds = array<i64: 2, 8, 1>}, {transform_indices = @transform_3, window_bounds = array<i64: 2, 1, 128>}, {pipeline_mode = #tpu.pipeline_mode<synchronous>, transform_indices = @transform_4, window_bounds = array<i64: 32, 32>}, {pipeline_mode = #tpu.pipeline_mode<synchronous>, transform_indices = @transform_5, window_bounds = array<i64: 1, 32>}, {pipeline_mode = #tpu.pipeline_mode<synchronous>, transform_indices = @transform_6, window_bounds = array<i64: 32, 32>}, {pipeline_mode = #tpu.pipeline_mode<synchronous>, transform_indices = @transform_7, window_bounds = array<i64: 1, 32>}, {transform_indices = @transform_8, window_bounds = array<i64: 2, 1, 128>}]} {
    %c0_i32 = arith.constant 0 : i32
    %0 = arith.cmpi eq, %arg1, %c0_i32 : i32
    %1 = arith.extui %0 : i1 to i32
    %c0_i32_0 = arith.constant 0 : i32
    %2 = arith.cmpi ne, %1, %c0_i32_0 : i32
    scf.if %2 {
      %cst_72 = arith.constant 0.000000e+00 : f32
      %198 = vector.broadcast %cst_72 : f32 to vector<2x1x128xf32>
      %c0_73 = arith.constant 0 : index
      %c0_74 = arith.constant 0 : index
      %c0_75 = arith.constant 0 : index
      %199 = vector.load %arg10[%c0_73, %c0_74, %c0_75] : memref<2x1x128xf32, #tpu.memory_space<vmem>>, vector<2x1x128xf32>
      tpu.vector_store %arg10[%c0_73, %c0_74, %c0_75], %198 {strides = array<i32>} : memref<2x1x128xf32, #tpu.memory_space<vmem>>, vector<2x1x128xf32>,
      %c0_76 = arith.constant 0 : index
      %c0_77 = arith.constant 0 : index
      %c0_78 = arith.constant 0 : index
      %200 = vector.load %arg3[%c0_76, %c0_77, %c0_78] : memref<2x128x32xbf16, #tpu.memory_space<vmem>>, vector<2x128x32xbf16>
      %201 = vector.shape_cast %200 : vector<2x128x32xbf16> to vector<256x32xbf16>
      %c0_79 = arith.constant 0 : index
      %c0_80 = arith.constant 0 : index
      %202 = vector.load %arg8[%c0_79, %c0_80] : memref<32x32xbf16, #tpu.memory_space<vmem>>, vector<32x32xbf16>
      %cst_81 = arith.constant dense<0.000000e+00> : vector<256x32xf32>
      %203 = tpu.matmul %201, %202, %cst_81 {dimension_numbers = #tpu.dot_dimension_numbers<[1], [0], [0], [1], [0, 0, 1, 1], [], []>} : vector<256x32xbf16>, vector<32x32xbf16>, vector<256x32xf32> -> vector<256x32xf32>
      %c0_82 = arith.constant 0 : index
      %c0_83 = arith.constant 0 : index
      %204 = vector.load %arg9[%c0_82, %c0_83] : memref<1x32xf32, #tpu.memory_space<vmem>>, vector<1x32xf32>
      %205 = vector.broadcast %204 : vector<1x32xf32> to vector<256x32xf32>
      %206 = arith.addf %203, %205 : vector<256x32xf32>
      %207 = vector.shape_cast %206 : vector<256x32xf32> to vector<2x128x32xf32>
      %208 = arith.truncf %207 : vector<2x128x32xf32> to vector<2x128x32xbf16>
      %c0_84 = arith.constant 0 : index
      %c0_85 = arith.constant 0 : index
      %c0_86 = arith.constant 0 : index
      %209 = vector.load %arg11[%c0_84, %c0_85, %c0_86] : memref<2x128x32xbf16, #tpu.memory_space<vmem>>, vector<2x128x32xbf16>
      tpu.vector_store %arg11[%c0_84, %c0_85, %c0_86], %208 {strides = array<i32>} : memref<2x128x32xbf16, #tpu.memory_space<vmem>>, vector<2x128x32xbf16>,
    } else {
    }
    %c0 = arith.constant 0 : index
    %c0_1 = arith.constant 0 : index
    %c0_2 = arith.constant 0 : index
    %3 = vector.load %arg2[%c0, %c0_1, %c0_2] : memref<2x8x32xbf16, #tpu.memory_space<vmem>>, vector<2x8x32xbf16>
    %4 = vector.shape_cast %3 : vector<2x8x32xbf16> to vector<16x32xbf16>
    %c0_3 = arith.constant 0 : index
    %c0_4 = arith.constant 0 : index
    %5 = vector.load %arg6[%c0_3, %c0_4] : memref<32x32xbf16, #tpu.memory_space<vmem>>, vector<32x32xbf16>
    %cst = arith.constant dense<0.000000e+00> : vector<16x32xf32>
    %6 = tpu.matmul %4, %5, %cst {dimension_numbers = #tpu.dot_dimension_numbers<[1], [0], [0], [1], [0, 0, 1, 1], [], []>} : vector<16x32xbf16>, vector<32x32xbf16>, vector<16x32xf32> -> vector<16x32xf32>
    %c0_5 = arith.constant 0 : index
    %c0_6 = arith.constant 0 : index
    %7 = vector.load %arg7[%c0_5, %c0_6] : memref<1x32xf32, #tpu.memory_space<vmem>>, vector<1x32xf32>
    %8 = vector.broadcast %7 : vector<1x32xf32> to vector<16x32xf32>
    %9 = arith.addf %6, %8 : vector<16x32xf32>
    %10 = vector.shape_cast %9 : vector<16x32xf32> to vector<2x8x32xf32>
    %11 = arith.truncf %10 : vector<2x8x32xf32> to vector<2x8x32xbf16>
    %12 = vector.extract_strided_slice %11 {offsets = [0, 0, 0], sizes = [1, 8, 32], strides = [1, 1, 1]} : vector<2x8x32xbf16> to vector<1x8x32xbf16>
    %13 = vector.shape_cast %12 : vector<1x8x32xbf16> to vector<8x32xbf16>
    %c0_7 = arith.constant 0 : index
    %c0_8 = arith.constant 0 : index
    %c0_9 = arith.constant 0 : index
    %14 = vector.load %arg11[%c0_7, %c0_8, %c0_9] : memref<2x128x32xbf16, #tpu.memory_space<vmem>>, vector<1x128x32xbf16>
    %15 = vector.shape_cast %14 : vector<1x128x32xbf16> to vector<128x32xbf16>
    %c0_10 = arith.constant 0 : index
    %c0_11 = arith.constant 0 : index
    %c0_12 = arith.constant 0 : index
    %16 = vector.load %arg5[%c0_10, %c0_11, %c0_12] : memref<2x1x128xf32, #tpu.memory_space<vmem>>, vector<1x1x128xf32>
    %17 = vector.shape_cast %16 : vector<1x1x128xf32> to vector<1x128xf32>
    %c0_13 = arith.constant 0 : index
    %c0_14 = arith.constant 0 : index
    %c0_15 = arith.constant 0 : index
    %18 = vector.load %arg4[%c0_13, %c0_14, %c0_15] : memref<2x8x1xf32, #tpu.memory_space<vmem>>, vector<1x8x1xf32>
    %19 = vector.shape_cast %18 : vector<1x8x1xf32> to vector<8x1xf32>
    %cst_16 = arith.constant 3.125000e-02 : f32
    %20 = vector.broadcast %cst_16 : f32 to vector<8x1xf32>
    %21 = arith.mulf %19, %20 : vector<8x1xf32>
    %cst_17 = arith.constant 0.000000e+00 : f32
    %22 = vector.broadcast %cst_17 : f32 to vector<1x128xf32>
    %23 = vector.extract_strided_slice %13 {offsets = [0, 0], sizes = [8, 8], strides = [1, 1]} : vector<8x32xbf16> to vector<8x8xbf16>
    %24 = vector.extract_strided_slice %15 {offsets = [0, 0], sizes = [128, 8], strides = [1, 1]} : vector<128x32xbf16> to vector<128x8xbf16>
    %cst_18 = arith.constant dense<0.000000e+00> : vector<8x128xf32>
    %25 = tpu.matmul %23, %24, %cst_18 {dimension_numbers = #tpu.dot_dimension_numbers<[1], [1], [0], [0], [0, 0, 1, 0], [], []>} : vector<8x8xbf16>, vector<128x8xbf16>, vector<8x128xf32> -> vector<8x128xf32>
    %26 = vector.broadcast %17 : vector<1x128xf32> to vector<8x128xf32>
    %27 = arith.addf %25, %26 : vector<8x128xf32>
    %cst_19 = arith.constant dense<0xFF800000> : vector<8xf32>
    %28 = vector.multi_reduction <maximumf>, %27, %cst_19 [1] : vector<8x128xf32> to vector<8xf32>
    %29 = vector.shape_cast %28 : vector<8xf32> to vector<8x1xf32>
    %30 = vector.broadcast %29 : vector<8x1xf32> to vector<8x128xf32>
    %31 = arith.subf %27, %30 : vector<8x128xf32>
    %32 = math.exp %31 : vector<8x128xf32>
    %cst_20 = arith.constant dense<0.000000e+00> : vector<8xf32>
    %33 = vector.multi_reduction <add>, %32, %cst_20 [1] : vector<8x128xf32> to vector<8xf32>
    %34 = vector.shape_cast %33 : vector<8xf32> to vector<8x1xf32>
    %35 = tpu.reciprocal %34 : vector<8x1xf32> -> vector<8x1xf32>
    %36 = arith.mulf %21, %35 : vector<8x1xf32>
    %37 = vector.broadcast %36 : vector<8x1xf32> to vector<8x128xf32>
    %38 = arith.mulf %32, %37 : vector<8x128xf32>
    %cst_21 = arith.constant dense<0.000000e+00> : vector<128xf32>
    %39 = vector.multi_reduction <add>, %38, %cst_21 [0] : vector<8x128xf32> to vector<128xf32>
    %40 = vector.shape_cast %39 : vector<128xf32> to vector<1x128xf32>
    %41 = arith.addf %22, %40 : vector<1x128xf32>
    %42 = vector.extract_strided_slice %13 {offsets = [0, 8], sizes = [8, 8], strides = [1, 1]} : vector<8x32xbf16> to vector<8x8xbf16>
    %43 = vector.extract_strided_slice %15 {offsets = [0, 8], sizes = [128, 8], strides = [1, 1]} : vector<128x32xbf16> to vector<128x8xbf16>
    %cst_22 = arith.constant dense<0.000000e+00> : vector<8x128xf32>
    %44 = tpu.matmul %42, %43, %cst_22 {dimension_numbers = #tpu.dot_dimension_numbers<[1], [1], [0], [0], [0, 0, 1, 0], [], []>} : vector<8x8xbf16>, vector<128x8xbf16>, vector<8x128xf32> -> vector<8x128xf32>
    %45 = vector.broadcast %17 : vector<1x128xf32> to vector<8x128xf32>
    %46 = arith.addf %44, %45 : vector<8x128xf32>
    %cst_23 = arith.constant dense<0xFF800000> : vector<8xf32>
    %47 = vector.multi_reduction <maximumf>, %46, %cst_23 [1] : vector<8x128xf32> to vector<8xf32>
    %48 = vector.shape_cast %47 : vector<8xf32> to vector<8x1xf32>
    %49 = vector.broadcast %48 : vector<8x1xf32> to vector<8x128xf32>
    %50 = arith.subf %46, %49 : vector<8x128xf32>
    %51 = math.exp %50 : vector<8x128xf32>
    %cst_24 = arith.constant dense<0.000000e+00> : vector<8xf32>
    %52 = vector.multi_reduction <add>, %51, %cst_24 [1] : vector<8x128xf32> to vector<8xf32>
    %53 = vector.shape_cast %52 : vector<8xf32> to vector<8x1xf32>
    %54 = tpu.reciprocal %53 : vector<8x1xf32> -> vector<8x1xf32>
    %55 = arith.mulf %21, %54 : vector<8x1xf32>
    %56 = vector.broadcast %55 : vector<8x1xf32> to vector<8x128xf32>
    %57 = arith.mulf %51, %56 : vector<8x128xf32>
    %cst_25 = arith.constant dense<0.000000e+00> : vector<128xf32>
    %58 = vector.multi_reduction <add>, %57, %cst_25 [0] : vector<8x128xf32> to vector<128xf32>
    %59 = vector.shape_cast %58 : vector<128xf32> to vector<1x128xf32>
    %60 = arith.addf %41, %59 : vector<1x128xf32>
    %61 = vector.extract_strided_slice %13 {offsets = [0, 16], sizes = [8, 8], strides = [1, 1]} : vector<8x32xbf16> to vector<8x8xbf16>
    %62 = vector.extract_strided_slice %15 {offsets = [0, 16], sizes = [128, 8], strides = [1, 1]} : vector<128x32xbf16> to vector<128x8xbf16>
    %cst_26 = arith.constant dense<0.000000e+00> : vector<8x128xf32>
    %63 = tpu.matmul %61, %62, %cst_26 {dimension_numbers = #tpu.dot_dimension_numbers<[1], [1], [0], [0], [0, 0, 1, 0], [], []>} : vector<8x8xbf16>, vector<128x8xbf16>, vector<8x128xf32> -> vector<8x128xf32>
    %64 = vector.broadcast %17 : vector<1x128xf32> to vector<8x128xf32>
    %65 = arith.addf %63, %64 : vector<8x128xf32>
    %cst_27 = arith.constant dense<0xFF800000> : vector<8xf32>
    %66 = vector.multi_reduction <maximumf>, %65, %cst_27 [1] : vector<8x128xf32> to vector<8xf32>
    %67 = vector.shape_cast %66 : vector<8xf32> to vector<8x1xf32>
    %68 = vector.broadcast %67 : vector<8x1xf32> to vector<8x128xf32>
    %69 = arith.subf %65, %68 : vector<8x128xf32>
    %70 = math.exp %69 : vector<8x128xf32>
    %cst_28 = arith.constant dense<0.000000e+00> : vector<8xf32>
    %71 = vector.multi_reduction <add>, %70, %cst_28 [1] : vector<8x128xf32> to vector<8xf32>
    %72 = vector.shape_cast %71 : vector<8xf32> to vector<8x1xf32>
    %73 = tpu.reciprocal %72 : vector<8x1xf32> -> vector<8x1xf32>
    %74 = arith.mulf %21, %73 : vector<8x1xf32>
    %75 = vector.broadcast %74 : vector<8x1xf32> to vector<8x128xf32>
    %76 = arith.mulf %70, %75 : vector<8x128xf32>
    %cst_29 = arith.constant dense<0.000000e+00> : vector<128xf32>
    %77 = vector.multi_reduction <add>, %76, %cst_29 [0] : vector<8x128xf32> to vector<128xf32>
    %78 = vector.shape_cast %77 : vector<128xf32> to vector<1x128xf32>
    %79 = arith.addf %60, %78 : vector<1x128xf32>
    %80 = vector.extract_strided_slice %13 {offsets = [0, 24], sizes = [8, 8], strides = [1, 1]} : vector<8x32xbf16> to vector<8x8xbf16>
    %81 = vector.extract_strided_slice %15 {offsets = [0, 24], sizes = [128, 8], strides = [1, 1]} : vector<128x32xbf16> to vector<128x8xbf16>
    %cst_30 = arith.constant dense<0.000000e+00> : vector<8x128xf32>
    %82 = tpu.matmul %80, %81, %cst_30 {dimension_numbers = #tpu.dot_dimension_numbers<[1], [1], [0], [0], [0, 0, 1, 0], [], []>} : vector<8x8xbf16>, vector<128x8xbf16>, vector<8x128xf32> -> vector<8x128xf32>
    %83 = vector.broadcast %17 : vector<1x128xf32> to vector<8x128xf32>
    %84 = arith.addf %82, %83 : vector<8x128xf32>
    %cst_31 = arith.constant dense<0xFF800000> : vector<8xf32>
    %85 = vector.multi_reduction <maximumf>, %84, %cst_31 [1] : vector<8x128xf32> to vector<8xf32>
    %86 = vector.shape_cast %85 : vector<8xf32> to vector<8x1xf32>
    %87 = vector.broadcast %86 : vector<8x1xf32> to vector<8x128xf32>
    %88 = arith.subf %84, %87 : vector<8x128xf32>
    %89 = math.exp %88 : vector<8x128xf32>
    %cst_32 = arith.constant dense<0.000000e+00> : vector<8xf32>
    %90 = vector.multi_reduction <add>, %89, %cst_32 [1] : vector<8x128xf32> to vector<8xf32>
    %91 = vector.shape_cast %90 : vector<8xf32> to vector<8x1xf32>
    %92 = tpu.reciprocal %91 : vector<8x1xf32> -> vector<8x1xf32>
    %93 = arith.mulf %21, %92 : vector<8x1xf32>
    %94 = vector.broadcast %93 : vector<8x1xf32> to vector<8x128xf32>
    %95 = arith.mulf %89, %94 : vector<8x128xf32>
    %cst_33 = arith.constant dense<0.000000e+00> : vector<128xf32>
    %96 = vector.multi_reduction <add>, %95, %cst_33 [0] : vector<8x128xf32> to vector<128xf32>
    %97 = vector.shape_cast %96 : vector<128xf32> to vector<1x128xf32>
    %98 = arith.addf %79, %97 : vector<1x128xf32>
    %c0_34 = arith.constant 0 : index
    %c0_35 = arith.constant 0 : index
    %c0_36 = arith.constant 0 : index
    %99 = vector.load %arg10[%c0_34, %c0_35, %c0_36] : memref<2x1x128xf32, #tpu.memory_space<vmem>>, vector<1x1x128xf32>
    %100 = vector.shape_cast %99 : vector<1x1x128xf32> to vector<1x128xf32>
    %101 = arith.addf %100, %98 : vector<1x128xf32>
    %c0_37 = arith.constant 0 : index
    %c0_38 = arith.constant 0 : index
    %c0_39 = arith.constant 0 : index
    %102 = vector.load %arg10[%c0_37, %c0_38, %c0_39] : memref<2x1x128xf32, #tpu.memory_space<vmem>>, vector<1x1x128xf32>
    %103 = vector.shape_cast %102 : vector<1x1x128xf32> to vector<1x128xf32>
    %104 = vector.shape_cast %101 : vector<1x128xf32> to vector<1x1x128xf32>
    tpu.vector_store %arg10[%c0_37, %c0_38, %c0_39], %104 {strides = array<i32>} : memref<2x1x128xf32, #tpu.memory_space<vmem>>, vector<1x1x128xf32>,
    %105 = vector.extract_strided_slice %11 {offsets = [1, 0, 0], sizes = [1, 8, 32], strides = [1, 1, 1]} : vector<2x8x32xbf16> to vector<1x8x32xbf16>
    %106 = vector.shape_cast %105 : vector<1x8x32xbf16> to vector<8x32xbf16>
    %c1 = arith.constant 1 : index
    %c0_40 = arith.constant 0 : index
    %c0_41 = arith.constant 0 : index
    %107 = vector.load %arg11[%c1, %c0_40, %c0_41] : memref<2x128x32xbf16, #tpu.memory_space<vmem>>, vector<1x128x32xbf16>
    %108 = vector.shape_cast %107 : vector<1x128x32xbf16> to vector<128x32xbf16>
    %c1_42 = arith.constant 1 : index
    %c0_43 = arith.constant 0 : index
    %c0_44 = arith.constant 0 : index
    %109 = vector.load %arg5[%c1_42, %c0_43, %c0_44] : memref<2x1x128xf32, #tpu.memory_space<vmem>>, vector<1x1x128xf32>
    %110 = vector.shape_cast %109 : vector<1x1x128xf32> to vector<1x128xf32>
    %c1_45 = arith.constant 1 : index
    %c0_46 = arith.constant 0 : index
    %c0_47 = arith.constant 0 : index
    %111 = vector.load %arg4[%c1_45, %c0_46, %c0_47] : memref<2x8x1xf32, #tpu.memory_space<vmem>>, vector<1x8x1xf32>
    %112 = vector.shape_cast %111 : vector<1x8x1xf32> to vector<8x1xf32>
    %cst_48 = arith.constant 3.125000e-02 : f32
    %113 = vector.broadcast %cst_48 : f32 to vector<8x1xf32>
    %114 = arith.mulf %112, %113 : vector<8x1xf32>
    %cst_49 = arith.constant 0.000000e+00 : f32
    %115 = vector.broadcast %cst_49 : f32 to vector<1x128xf32>
    %116 = vector.extract_strided_slice %106 {offsets = [0, 0], sizes = [8, 8], strides = [1, 1]} : vector<8x32xbf16> to vector<8x8xbf16>
    %117 = vector.extract_strided_slice %108 {offsets = [0, 0], sizes = [128, 8], strides = [1, 1]} : vector<128x32xbf16> to vector<128x8xbf16>
    %cst_50 = arith.constant dense<0.000000e+00> : vector<8x128xf32>
    %118 = tpu.matmul %116, %117, %cst_50 {dimension_numbers = #tpu.dot_dimension_numbers<[1], [1], [0], [0], [0, 0, 1, 0], [], []>} : vector<8x8xbf16>, vector<128x8xbf16>, vector<8x128xf32> -> vector<8x128xf32>
    %119 = vector.broadcast %110 : vector<1x128xf32> to vector<8x128xf32>
    %120 = arith.addf %118, %119 : vector<8x128xf32>
    %cst_51 = arith.constant dense<0xFF800000> : vector<8xf32>
    %121 = vector.multi_reduction <maximumf>, %120, %cst_51 [1] : vector<8x128xf32> to vector<8xf32>
    %122 = vector.shape_cast %121 : vector<8xf32> to vector<8x1xf32>
    %123 = vector.broadcast %122 : vector<8x1xf32> to vector<8x128xf32>
    %124 = arith.subf %120, %123 : vector<8x128xf32>
    %125 = math.exp %124 : vector<8x128xf32>
    %cst_52 = arith.constant dense<0.000000e+00> : vector<8xf32>
    %126 = vector.multi_reduction <add>, %125, %cst_52 [1] : vector<8x128xf32> to vector<8xf32>
    %127 = vector.shape_cast %126 : vector<8xf32> to vector<8x1xf32>
    %128 = tpu.reciprocal %127 : vector<8x1xf32> -> vector<8x1xf32>
    %129 = arith.mulf %114, %128 : vector<8x1xf32>
    %130 = vector.broadcast %129 : vector<8x1xf32> to vector<8x128xf32>
    %131 = arith.mulf %125, %130 : vector<8x128xf32>
    %cst_53 = arith.constant dense<0.000000e+00> : vector<128xf32>
    %132 = vector.multi_reduction <add>, %131, %cst_53 [0] : vector<8x128xf32> to vector<128xf32>
    %133 = vector.shape_cast %132 : vector<128xf32> to vector<1x128xf32>
    %134 = arith.addf %115, %133 : vector<1x128xf32>
    %135 = vector.extract_strided_slice %106 {offsets = [0, 8], sizes = [8, 8], strides = [1, 1]} : vector<8x32xbf16> to vector<8x8xbf16>
    %136 = vector.extract_strided_slice %108 {offsets = [0, 8], sizes = [128, 8], strides = [1, 1]} : vector<128x32xbf16> to vector<128x8xbf16>
    %cst_54 = arith.constant dense<0.000000e+00> : vector<8x128xf32>
    %137 = tpu.matmul %135, %136, %cst_54 {dimension_numbers = #tpu.dot_dimension_numbers<[1], [1], [0], [0], [0, 0, 1, 0], [], []>} : vector<8x8xbf16>, vector<128x8xbf16>, vector<8x128xf32> -> vector<8x128xf32>
    %138 = vector.broadcast %110 : vector<1x128xf32> to vector<8x128xf32>
    %139 = arith.addf %137, %138 : vector<8x128xf32>
    %cst_55 = arith.constant dense<0xFF800000> : vector<8xf32>
    %140 = vector.multi_reduction <maximumf>, %139, %cst_55 [1] : vector<8x128xf32> to vector<8xf32>
    %141 = vector.shape_cast %140 : vector<8xf32> to vector<8x1xf32>
    %142 = vector.broadcast %141 : vector<8x1xf32> to vector<8x128xf32>
    %143 = arith.subf %139, %142 : vector<8x128xf32>
    %144 = math.exp %143 : vector<8x128xf32>
    %cst_56 = arith.constant dense<0.000000e+00> : vector<8xf32>
    %145 = vector.multi_reduction <add>, %144, %cst_56 [1] : vector<8x128xf32> to vector<8xf32>
    %146 = vector.shape_cast %145 : vector<8xf32> to vector<8x1xf32>
    %147 = tpu.reciprocal %146 : vector<8x1xf32> -> vector<8x1xf32>
    %148 = arith.mulf %114, %147 : vector<8x1xf32>
    %149 = vector.broadcast %148 : vector<8x1xf32> to vector<8x128xf32>
    %150 = arith.mulf %144, %149 : vector<8x128xf32>
    %cst_57 = arith.constant dense<0.000000e+00> : vector<128xf32>
    %151 = vector.multi_reduction <add>, %150, %cst_57 [0] : vector<8x128xf32> to vector<128xf32>
    %152 = vector.shape_cast %151 : vector<128xf32> to vector<1x128xf32>
    %153 = arith.addf %134, %152 : vector<1x128xf32>
    %154 = vector.extract_strided_slice %106 {offsets = [0, 16], sizes = [8, 8], strides = [1, 1]} : vector<8x32xbf16> to vector<8x8xbf16>
    %155 = vector.extract_strided_slice %108 {offsets = [0, 16], sizes = [128, 8], strides = [1, 1]} : vector<128x32xbf16> to vector<128x8xbf16>
    %cst_58 = arith.constant dense<0.000000e+00> : vector<8x128xf32>
    %156 = tpu.matmul %154, %155, %cst_58 {dimension_numbers = #tpu.dot_dimension_numbers<[1], [1], [0], [0], [0, 0, 1, 0], [], []>} : vector<8x8xbf16>, vector<128x8xbf16>, vector<8x128xf32> -> vector<8x128xf32>
    %157 = vector.broadcast %110 : vector<1x128xf32> to vector<8x128xf32>
    %158 = arith.addf %156, %157 : vector<8x128xf32>
    %cst_59 = arith.constant dense<0xFF800000> : vector<8xf32>
    %159 = vector.multi_reduction <maximumf>, %158, %cst_59 [1] : vector<8x128xf32> to vector<8xf32>
    %160 = vector.shape_cast %159 : vector<8xf32> to vector<8x1xf32>
    %161 = vector.broadcast %160 : vector<8x1xf32> to vector<8x128xf32>
    %162 = arith.subf %158, %161 : vector<8x128xf32>
    %163 = math.exp %162 : vector<8x128xf32>
    %cst_60 = arith.constant dense<0.000000e+00> : vector<8xf32>
    %164 = vector.multi_reduction <add>, %163, %cst_60 [1] : vector<8x128xf32> to vector<8xf32>
    %165 = vector.shape_cast %164 : vector<8xf32> to vector<8x1xf32>
    %166 = tpu.reciprocal %165 : vector<8x1xf32> -> vector<8x1xf32>
    %167 = arith.mulf %114, %166 : vector<8x1xf32>
    %168 = vector.broadcast %167 : vector<8x1xf32> to vector<8x128xf32>
    %169 = arith.mulf %163, %168 : vector<8x128xf32>
    %cst_61 = arith.constant dense<0.000000e+00> : vector<128xf32>
    %170 = vector.multi_reduction <add>, %169, %cst_61 [0] : vector<8x128xf32> to vector<128xf32>
    %171 = vector.shape_cast %170 : vector<128xf32> to vector<1x128xf32>
    %172 = arith.addf %153, %171 : vector<1x128xf32>
    %173 = vector.extract_strided_slice %106 {offsets = [0, 24], sizes = [8, 8], strides = [1, 1]} : vector<8x32xbf16> to vector<8x8xbf16>
    %174 = vector.extract_strided_slice %108 {offsets = [0, 24], sizes = [128, 8], strides = [1, 1]} : vector<128x32xbf16> to vector<128x8xbf16>
    %cst_62 = arith.constant dense<0.000000e+00> : vector<8x128xf32>
    %175 = tpu.matmul %173, %174, %cst_62 {dimension_numbers = #tpu.dot_dimension_numbers<[1], [1], [0], [0], [0, 0, 1, 0], [], []>} : vector<8x8xbf16>, vector<128x8xbf16>, vector<8x128xf32> -> vector<8x128xf32>
    %176 = vector.broadcast %110 : vector<1x128xf32> to vector<8x128xf32>
    %177 = arith.addf %175, %176 : vector<8x128xf32>
    %cst_63 = arith.constant dense<0xFF800000> : vector<8xf32>
    %178 = vector.multi_reduction <maximumf>, %177, %cst_63 [1] : vector<8x128xf32> to vector<8xf32>
    %179 = vector.shape_cast %178 : vector<8xf32> to vector<8x1xf32>
    %180 = vector.broadcast %179 : vector<8x1xf32> to vector<8x128xf32>
    %181 = arith.subf %177, %180 : vector<8x128xf32>
    %182 = math.exp %181 : vector<8x128xf32>
    %cst_64 = arith.constant dense<0.000000e+00> : vector<8xf32>
    %183 = vector.multi_reduction <add>, %182, %cst_64 [1] : vector<8x128xf32> to vector<8xf32>
    %184 = vector.shape_cast %183 : vector<8xf32> to vector<8x1xf32>
    %185 = tpu.reciprocal %184 : vector<8x1xf32> -> vector<8x1xf32>
    %186 = arith.mulf %114, %185 : vector<8x1xf32>
    %187 = vector.broadcast %186 : vector<8x1xf32> to vector<8x128xf32>
    %188 = arith.mulf %182, %187 : vector<8x128xf32>
    %cst_65 = arith.constant dense<0.000000e+00> : vector<128xf32>
    %189 = vector.multi_reduction <add>, %188, %cst_65 [0] : vector<8x128xf32> to vector<128xf32>
    %190 = vector.shape_cast %189 : vector<128xf32> to vector<1x128xf32>
    %191 = arith.addf %172, %190 : vector<1x128xf32>
    %c1_66 = arith.constant 1 : index
    %c0_67 = arith.constant 0 : index
    %c0_68 = arith.constant 0 : index
    %192 = vector.load %arg10[%c1_66, %c0_67, %c0_68] : memref<2x1x128xf32, #tpu.memory_space<vmem>>, vector<1x1x128xf32>
    %193 = vector.shape_cast %192 : vector<1x1x128xf32> to vector<1x128xf32>
    %194 = arith.addf %193, %191 : vector<1x128xf32>
    %c1_69 = arith.constant 1 : index
    %c0_70 = arith.constant 0 : index
    %c0_71 = arith.constant 0 : index
    %195 = vector.load %arg10[%c1_69, %c0_70, %c0_71] : memref<2x1x128xf32, #tpu.memory_space<vmem>>, vector<1x1x128xf32>
    %196 = vector.shape_cast %195 : vector<1x1x128xf32> to vector<1x128xf32>
    %197 = vector.shape_cast %194 : vector<1x128xf32> to vector<1x1x128xf32>
    tpu.vector_store %arg10[%c1_69, %c0_70, %c0_71], %197 {strides = array<i32>} : memref<2x1x128xf32, #tpu.memory_space<vmem>>, vector<1x1x128xf32>,
    return
  }
  func.func @transform_0(%arg0: i32, %arg1: i32) -> (i32, i32, i32) {
    %c0_i32 = arith.constant 0 : i32
    %c0_i32_0 = arith.constant 0 : i32
    return %arg0, %arg1, %c0_i32 : i32, i32, i32
  }
  func.func @transform_1(%arg0: i32, %arg1: i32) -> (i32, i32, i32) {
    %c0_i32 = arith.constant 0 : i32
    %c0_i32_0 = arith.constant 0 : i32
    %c0_i32_1 = arith.constant 0 : i32
    return %arg0, %c0_i32, %c0_i32_0 : i32, i32, i32
  }
  func.func @transform_2(%arg0: i32, %arg1: i32) -> (i32, i32, i32) {
    %c0_i32 = arith.constant 0 : i32
    %c0_i32_0 = arith.constant 0 : i32
    return %arg0, %arg1, %c0_i32 : i32, i32, i32
  }
  func.func @transform_3(%arg0: i32, %arg1: i32) -> (i32, i32, i32) {
    %c0_i32 = arith.constant 0 : i32
    %c0_i32_0 = arith.constant 0 : i32
    %c0_i32_1 = arith.constant 0 : i32
    return %arg0, %c0_i32, %c0_i32_0 : i32, i32, i32
  }
  func.func @transform_4(%arg0: i32, %arg1: i32) -> (i32, i32) {
    %c0_i32 = arith.constant 0 : i32
    %c0_i32_0 = arith.constant 0 : i32
    %c0_i32_1 = arith.constant 0 : i32
    return %c0_i32, %c0_i32_0 : i32, i32
  }
  func.func @transform_5(%arg0: i32, %arg1: i32) -> (i32, i32) {
    %c0_i32 = arith.constant 0 : i32
    %c0_i32_0 = arith.constant 0 : i32
    %c0_i32_1 = arith.constant 0 : i32
    return %c0_i32, %c0_i32_0 : i32, i32
  }
  func.func @transform_6(%arg0: i32, %arg1: i32) -> (i32, i32) {
    %c0_i32 = arith.constant 0 : i32
    %c0_i32_0 = arith.constant 0 : i32
    %c0_i32_1 = arith.constant 0 : i32
    return %c0_i32, %c0_i32_0 : i32, i32
  }
  func.func @transform_7(%arg0: i32, %arg1: i32) -> (i32, i32) {
    %c0_i32 = arith.constant 0 : i32
    %c0_i32_0 = arith.constant 0 : i32
    %c0_i32_1 = arith.constant 0 : i32
    return %c0_i32, %c0_i32_0 : i32, i32
  }
  func.func @transform_8(%arg0: i32, %arg1: i32) -> (i32, i32, i32) {
    %c0_i32 = arith.constant 0 : i32
    %c0_i32_0 = arith.constant 0 : i32
    %c0_i32_1 = arith.constant 0 : i32
    return %arg0, %c0_i32, %c0_i32_0 : i32, i32, i32
  }
}

</mosaic_0001>

<llo_original>
// kernel: tpu_custom_call.1
$region0: #{tpu_custom_call.1}
  #allocation0 [shape = 'u32[]', space=smem, size = 0x4, offset = 0x4, fixed_abs, tag = 'smem constant byte address 0x4 - core index']
  #allocation1 [shape = 'u32[72,128]{1,0:T(1,128)}', space=vmem, size = 0x9000, scoped, tag = 'internal scratch']
  #allocation2 [shape = 'bf16[2,128,32]{2,1,0:T(8,128)(2,1)}', space=vmem, size = 0x10000, scoped, tag = 'scratch operand']
  %s0 = inlined_call_operand.vmem [shape: bf16[2,8,32], index: 0, kind: input, shape index: {}]
  %s1 = inlined_call_operand.vmem [shape: bf16[2,128,32], index: 1, kind: input, shape index: {}]
  %s2 = inlined_call_operand.vmem [shape: f32[2,8,1], index: 2, kind: input, shape index: {}]
  %s3 = inlined_call_operand.vmem [shape: f32[2,1,128], index: 3, kind: input, shape index: {}]
  %s4 = inlined_call_operand.vmem [shape: bf16[32,32], index: 4, kind: input, shape index: {}]
  %s5 = inlined_call_operand.vmem [shape: f32[1,32], index: 5, kind: input, shape index: {}]
  %s6 = inlined_call_operand.vmem [shape: bf16[32,32], index: 6, kind: input, shape index: {}]
  %s7 = inlined_call_operand.vmem [shape: f32[1,32], index: 7, kind: input, shape index: {}]
  %s8 = inlined_call_operand.hbm [shape: f32[2,1,128], index: 8, kind: output, shape index: {}]
  %s9 = sld [smem:[#allocation0]]
  $region46: #{tpu_custom_call.1} parent=0
    _
  %s11 = ssub.s32 1, %s9
  %s12 = scalar_select 0, %s11, %s9
  $region1: #{tpu_custom_call.1} parent=0
    #allocation3 [shape = 'u8[1024]{0}', space=vmem, size = 0x400, scoped, tag = 'output window, operand 0, single buffered']
    #allocation4 [shape = 's32[1]{0}', space=sflag, size = 0x4, scoped, tag = 'scoped memory for tpu_custom_call.1']
    %13 = vsyncpa [#allocation4], 0
    // Predicated region
    $region2: #{tpu_custom_call.1} parent=1 // pred_check
      _
    $region3: #{tpu_custom_call.1} parent=1 // pred_check_branch
      %15 = sbr.rel (0) target = $region5
    $region4: #{tpu_custom_call.1} parent=1 // pred_region
      _
    $region5: #{tpu_custom_call.1} parent=1 // pred_fallthru
      _
    // Predicated region
    $region6: #{tpu_custom_call.1} parent=1 // pred_check
      _
    $region7: #{tpu_custom_call.1} parent=1 // pred_check_branch
      %17 = sbr.rel (0) target = $region9
    $region8: #{tpu_custom_call.1} parent=1 // pred_region
      _
    $region9: #{tpu_custom_call.1} parent=1 // pred_fallthru
      _
    // Predicated region
    $region10: #{tpu_custom_call.1} parent=1 // pred_check
      _
    $region11: #{tpu_custom_call.1} parent=1 // pred_check_branch
      %19 = sbr.rel (0) target = $region13
    $region12: #{tpu_custom_call.1} parent=1 // pred_region
      _
    $region13: #{tpu_custom_call.1} parent=1 // pred_fallthru
      _
    // Predicated region
    $region14: #{tpu_custom_call.1} parent=1 // pred_check
      _
    $region15: #{tpu_custom_call.1} parent=1 // pred_check_branch
      %21 = sbr.rel (0) target = $region17
    $region16: #{tpu_custom_call.1} parent=1 // pred_region
      _
    $region17: #{tpu_custom_call.1} parent=1 // pred_fallthru
      _
    // Predicated region
    $region18: #{tpu_custom_call.1} parent=1 // pred_check
      _
    $region19: #{tpu_custom_call.1} parent=1 // pred_check_branch
      %23 = sbr.rel (0) target = $region21
    $region20: #{tpu_custom_call.1} parent=1 // pred_region
      _
    $region21: #{tpu_custom_call.1} parent=1 // pred_fallthru
      _
    // Predicated region
    $region22: #{tpu_custom_call.1} parent=1 // pred_check
      _
    $region23: #{tpu_custom_call.1} parent=1 // pred_check_branch
      %25 = sbr.rel (0) target = $region25
    $region24: #{tpu_custom_call.1} parent=1 // pred_region
      _
    $region25: #{tpu_custom_call.1} parent=1 // pred_fallthru
      _
    // Predicated region
    $region26: #{tpu_custom_call.1} parent=1 // pred_check
      _
    $region27: #{tpu_custom_call.1} parent=1 // pred_check_branch
      %27 = sbr.rel (0) target = $region29
    $region28: #{tpu_custom_call.1} parent=1 // pred_region
      _
    $region29: #{tpu_custom_call.1} parent=1 // pred_fallthru
      _
    // Predicated region
    $region30: #{tpu_custom_call.1} parent=1 // pred_check
      _
    $region31: #{tpu_custom_call.1} parent=1 // pred_check_branch
      %29 = sbr.rel (0) target = $region33
    $region32: #{tpu_custom_call.1} parent=1 // pred_region
      _
    $region33: #{tpu_custom_call.1} parent=1 // pred_fallthru
      _
    %p31 = scmp.eq.s32.totalorder 0, 0
    // Predicated region
    $region34: #{tpu_custom_call.1} parent=1 // pred_check
      %p32 = pneg %p31
    $region35: #{tpu_custom_call.1} parent=1 // pred_check_branch
      %34 = sbr.rel (%p32) target = $region37
    $region36: #{tpu_custom_call.1} parent=1 // pred_region
      %35 = vst [vmem:[#allocation3] sm:$0x1] 0.0
      %36 = vst [vmem:[#allocation3 + $0x1] sm:$0x1] 0.0
      %v37 = vld [vmem:[%s1] sm:$0xf]
      %v38 = vld [vmem:[%s1 + $0x4] sm:$0xf]
      %v39 = vld [vmem:[%s1 + $0x8] sm:$0xf]
      %v40 = vld [vmem:[%s1 + $0xc] sm:$0xf]
      %v41 = vld [vmem:[%s1 + $0x10] sm:$0xf]
      %v42 = vld [vmem:[%s1 + $0x14] sm:$0xf]
      %v43 = vld [vmem:[%s1 + $0x18] sm:$0xf]
      %v44 = vld [vmem:[%s1 + $0x1c] sm:$0xf]
      %v45 = vld [vmem:[%s1 + $0x20] sm:$0xf]
      %v46 = vld [vmem:[%s1 + $0x24] sm:$0xf]
      %v47 = vld [vmem:[%s1 + $0x28] sm:$0xf]
      %v48 = vld [vmem:[%s1 + $0x2c] sm:$0xf]
      %v49 = vld [vmem:[%s1 + $0x30] sm:$0xf]
      %v50 = vld [vmem:[%s1 + $0x34] sm:$0xf]
      %v51 = vld [vmem:[%s1 + $0x38] sm:$0xf]
      %v52 = vld [vmem:[%s1 + $0x3c] sm:$0xf]
      %v53 = vld [vmem:[%s1 + $0x40] sm:$0xf]
      %v54 = vld [vmem:[%s1 + $0x44] sm:$0xf]
      %v55 = vld [vmem:[%s1 + $0x48] sm:$0xf]
      %v56 = vld [vmem:[%s1 + $0x4c] sm:$0xf]
      %v57 = vld [vmem:[%s1 + $0x50] sm:$0xf]
      %v58 = vld [vmem:[%s1 + $0x54] sm:$0xf]
      %v59 = vld [vmem:[%s1 + $0x58] sm:$0xf]
      %v60 = vld [vmem:[%s1 + $0x5c] sm:$0xf]
      %v61 = vld [vmem:[%s1 + $0x60] sm:$0xf]
      %v62 = vld [vmem:[%s1 + $0x64] sm:$0xf]
      %v63 = vld [vmem:[%s1 + $0x68] sm:$0xf]
      %v64 = vld [vmem:[%s1 + $0x6c] sm:$0xf]
      %v65 = vld [vmem:[%s1 + $0x70] sm:$0xf]
      %v66 = vld [vmem:[%s1 + $0x74] sm:$0xf]
      %v67 = vld [vmem:[%s1 + $0x78] sm:$0xf]
      %v68 = vld [vmem:[%s1 + $0x7c] sm:$0xf]
      %v69 = vld [vmem:[%s6] sm:$0xf]
      %v70 = vld [vmem:[%s6 + $0x4] sm:$0xf]
      %v71 = vld [vmem:[%s6 + $0x8] sm:$0xf]
      %v72 = vld [vmem:[%s6 + $0xc] sm:$0xf]
      %v73 = vld [vmem:[%s7] sm:$0x1]
      %v75 = vperm.slane %v73, 0
      %v109 = vunpack.c.l.b16 %v37
      %v110 = vunpack.c.l.b16 %v38
      %v111 = vunpack.c.l.b16 %v39
      %v112 = vunpack.c.l.b16 %v40
      %v113 = vunpack.c.l.b16 %v41
      %v114 = vunpack.c.l.b16 %v42
      %v115 = vunpack.c.l.b16 %v43
      %v116 = vunpack.c.l.b16 %v44
      %v117 = vunpack.c.l.b16 %v45
      %v118 = vunpack.c.l.b16 %v46
      %v119 = vunpack.c.l.b16 %v47
      %v120 = vunpack.c.l.b16 %v48
      %v121 = vunpack.c.l.b16 %v49
      %v122 = vunpack.c.l.b16 %v50
      %v123 = vunpack.c.l.b16 %v51
      %v124 = vunpack.c.l.b16 %v52
      %v125 = vunpack.c.l.b16 %v53
      %v126 = vunpack.c.l.b16 %v54
      %v127 = vunpack.c.l.b16 %v55
      %v128 = vunpack.c.l.b16 %v56
      %v129 = vunpack.c.l.b16 %v57
      %v130 = vunpack.c.l.b16 %v58
      %v131 = vunpack.c.l.b16 %v59
      %v132 = vunpack.c.l.b16 %v60
      %v133 = vunpack.c.l.b16 %v61
      %v134 = vunpack.c.l.b16 %v62
      %v135 = vunpack.c.l.b16 %v63
      %v136 = vunpack.c.l.b16 %v64
      %v137 = vunpack.c.l.b16 %v65
      %v138 = vunpack.c.l.b16 %v66
      %v139 = vunpack.c.l.b16 %v67
      %v140 = vunpack.c.l.b16 %v68
      %v141 = vpack.c.b16 %v110, %v109
      %v142 = vpack.c.b16 %v112, %v111
      %v143 = vpack.c.b16 %v114, %v113
      %v144 = vpack.c.b16 %v116, %v115
      %v145 = vpack.c.b16 %v118, %v117
      %v146 = vpack.c.b16 %v120, %v119
      %v147 = vpack.c.b16 %v122, %v121
      %v148 = vpack.c.b16 %v124, %v123
      %v149 = vpack.c.b16 %v126, %v125
      %v150 = vpack.c.b16 %v128, %v127
      %v151 = vpack.c.b16 %v130, %v129
      %v152 = vpack.c.b16 %v132, %v131
      %v153 = vpack.c.b16 %v134, %v133
      %v154 = vpack.c.b16 %v136, %v135
      %v155 = vpack.c.b16 %v138, %v137
      %v156 = vpack.c.b16 %v140, %v139
      %v161 = vunpack.c.l.b16 %v69
      %v162 = vunpack.c.l.b16 %v70
      %v163 = vunpack.c.l.b16 %v71
      %v164 = vunpack.c.l.b16 %v72
      %v165 = vpack.c.b16 %v162, %v161
      %v166 = vpack.c.b16 %v164, %v163
      %vm169 = vcmask 261120
      %v171 = vsel %vm169, %v141, 0
      %v174 = vsel %vm169, %v142, 0
      %v177 = vsel %vm169, %v143, 0
      %v180 = vsel %vm169, %v144, 0
      %v183 = vsel %vm169, %v145, 0
      %v186 = vsel %vm169, %v146, 0
      %v189 = vsel %vm169, %v147, 0
      %v192 = vsel %vm169, %v148, 0
      %v195 = vsel %vm169, %v149, 0
      %v198 = vsel %vm169, %v150, 0
      %v201 = vsel %vm169, %v151, 0
      %v204 = vsel %vm169, %v152, 0
      %v207 = vsel %vm169, %v153, 0
      %v210 = vsel %vm169, %v154, 0
      %v213 = vsel %vm169, %v155, 0
      %v216 = vsel %vm169, %v156, 0
      %218 = vmatpush.bf16.msra.mxu0 0
      %219 = vmatpush.bf16.msra.mxu0 0
      %220 = vmatpush.bf16.msra.mxu0 0
      %221 = vmatpush.bf16.msra.mxu0 0
      %222 = vmatpush.bf16.msra.mxu0 0
      %223 = vmatpush.bf16.msra.mxu0 0
      %224 = vmatpush.bf16.msra.mxu0 %v166
      %225 = vmatpush.bf16.msra.mxu0 %v165
      %226 = vmatmul.bf16.gmra.mxu0 %v171
      %v227 = vpop.f32.mrf.mxu0
      %v228 = vadd.f32 %v75, %v227
      %v229 = vpop.f32.mrf.mxu0
      %v230 = vadd.f32 %v75, %v229
      %231 = vmatmul.bf16.gmra.mxu0 %v174
      %v232 = vpop.f32.mrf.mxu0
      %v233 = vadd.f32 %v75, %v232
      %v234 = vpop.f32.mrf.mxu0
      %v235 = vadd.f32 %v75, %v234
      %236 = vmatmul.bf16.gmra.mxu0 %v177
      %v237 = vpop.f32.mrf.mxu0
      %v238 = vadd.f32 %v75, %v237
      %v239 = vpop.f32.mrf.mxu0
      %v240 = vadd.f32 %v75, %v239
      %241 = vmatmul.bf16.gmra.mxu0 %v180
      %v242 = vpop.f32.mrf.mxu0
      %v243 = vadd.f32 %v75, %v242
      %v244 = vpop.f32.mrf.mxu0
      %v245 = vadd.f32 %v75, %v244
      %246 = vmatmul.bf16.gmra.mxu0 %v183
      %v247 = vpop.f32.mrf.mxu0
      %v248 = vadd.f32 %v75, %v247
      %v249 = vpop.f32.mrf.mxu0
      %v250 = vadd.f32 %v75, %v249
      %251 = vmatmul.bf16.gmra.mxu0 %v186
      %v252 = vpop.f32.mrf.mxu0
      %v253 = vadd.f32 %v75, %v252
      %v254 = vpop.f32.mrf.mxu0
      %v255 = vadd.f32 %v75, %v254
      %256 = vmatmul.bf16.gmra.mxu0 %v189
      %v257 = vpop.f32.mrf.mxu0
      %v258 = vadd.f32 %v75, %v257
      %v259 = vpop.f32.mrf.mxu0
      %v260 = vadd.f32 %v75, %v259
      %261 = vmatmul.bf16.gmra.mxu0 %v192
      %v262 = vpop.f32.mrf.mxu0
      %v263 = vadd.f32 %v75, %v262
      %v264 = vpop.f32.mrf.mxu0
      %v265 = vadd.f32 %v75, %v264
      %266 = vmatmul.bf16.gmra.mxu0 %v195
      %v267 = vpop.f32.mrf.mxu0
      %v268 = vadd.f32 %v75, %v267
      %v269 = vpop.f32.mrf.mxu0
      %v270 = vadd.f32 %v75, %v269
      %271 = vmatmul.bf16.gmra.mxu0 %v198
      %v272 = vpop.f32.mrf.mxu0
      %v273 = vadd.f32 %v75, %v272
      %v274 = vpop.f32.mrf.mxu0
      %v275 = vadd.f32 %v75, %v274
      %276 = vmatmul.bf16.gmra.mxu0 %v201
      %v277 = vpop.f32.mrf.mxu0
      %v278 = vadd.f32 %v75, %v277
      %v279 = vpop.f32.mrf.mxu0
      %v280 = vadd.f32 %v75, %v279
      %281 = vmatmul.bf16.gmra.mxu0 %v204
      %v282 = vpop.f32.mrf.mxu0
      %v283 = vadd.f32 %v75, %v282
      %v284 = vpop.f32.mrf.mxu0
      %v285 = vadd.f32 %v75, %v284
      %286 = vmatmul.bf16.gmra.mxu0 %v207
      %v287 = vpop.f32.mrf.mxu0
      %v288 = vadd.f32 %v75, %v287
      %v289 = vpop.f32.mrf.mxu0
      %v290 = vadd.f32 %v75, %v289
      %291 = vmatmul.bf16.gmra.mxu0 %v210
      %v292 = vpop.f32.mrf.mxu0
      %v293 = vadd.f32 %v75, %v292
      %v294 = vpop.f32.mrf.mxu0
      %v295 = vadd.f32 %v75, %v294
      %296 = vmatmul.bf16.gmra.mxu0 %v213
      %v297 = vpop.f32.mrf.mxu0
      %v298 = vadd.f32 %v75, %v297
      %v299 = vpop.f32.mrf.mxu0
      %v300 = vadd.f32 %v75, %v299
      %301 = vmatmul.bf16.gmra.mxu0 %v216
      %v302 = vpop.f32.mrf.mxu0
      %v303 = vadd.f32 %v75, %v302
      %v304 = vpop.f32.mrf.mxu0
      %v305 = vadd.f32 %v75, %v304
      %306 = vdwg.mxu0
      %v307 = vpack.c.bf16 %v228, %v228
      %v308 = vpack.c.bf16 %v230, %v230
      %v309 = vpack.c.bf16 %v233, %v233
      %v310 = vpack.c.bf16 %v235, %v235
      %v311 = vpack.c.bf16 %v238, %v238
      %v312 = vpack.c.bf16 %v240, %v240
      %v313 = vpack.c.bf16 %v243, %v243
      %v314 = vpack.c.bf16 %v245, %v245
      %v315 = vpack.c.bf16 %v248, %v248
      %v316 = vpack.c.bf16 %v250, %v250
      %v317 = vpack.c.bf16 %v253, %v253
      %v318 = vpack.c.bf16 %v255, %v255
      %v319 = vpack.c.bf16 %v258, %v258
      %v320 = vpack.c.bf16 %v260, %v260
      %v321 = vpack.c.bf16 %v263, %v263
      %v322 = vpack.c.bf16 %v265, %v265
      %v323 = vpack.c.bf16 %v268, %v268
      %v324 = vpack.c.bf16 %v270, %v270
      %v325 = vpack.c.bf16 %v273, %v273
      %v326 = vpack.c.bf16 %v275, %v275
      %v327 = vpack.c.bf16 %v278, %v278
      %v328 = vpack.c.bf16 %v280, %v280
      %v329 = vpack.c.bf16 %v283, %v283
      %v330 = vpack.c.bf16 %v285, %v285
      %v331 = vpack.c.bf16 %v288, %v288
      %v332 = vpack.c.bf16 %v290, %v290
      %v333 = vpack.c.bf16 %v293, %v293
      %v334 = vpack.c.bf16 %v295, %v295
      %v335 = vpack.c.bf16 %v298, %v298
      %v336 = vpack.c.bf16 %v300, %v300
      %v337 = vpack.c.bf16 %v303, %v303
      %v338 = vpack.c.bf16 %v305, %v305
      %vm339 = vcmask 257024
      %340 = vst.msk [vmem:[#allocation2] sm:$0xf] %vm339, %v307
      %341 = vst.msk [vmem:[#allocation2 + $0x4] sm:$0xf] %vm339, %v308
      %342 = vst.msk [vmem:[#allocation2 + $0x8] sm:$0xf] %vm339, %v309
      %343 = vst.msk [vmem:[#allocation2 + $0xc] sm:$0xf] %vm339, %v310
      %344 = vst.msk [vmem:[#allocation2 + $0x10] sm:$0xf] %vm339, %v311
      %345 = vst.msk [vmem:[#allocation2 + $0x14] sm:$0xf] %vm339, %v312
      %346 = vst.msk [vmem:[#allocation2 + $0x18] sm:$0xf] %vm339, %v313
      %347 = vst.msk [vmem:[#allocation2 + $0x1c] sm:$0xf] %vm339, %v314
      %348 = vst.msk [vmem:[#allocation2 + $0x20] sm:$0xf] %vm339, %v315
      %349 = vst.msk [vmem:[#allocation2 + $0x24] sm:$0xf] %vm339, %v316
      %350 = vst.msk [vmem:[#allocation2 + $0x28] sm:$0xf] %vm339, %v317
      %351 = vst.msk [vmem:[#allocation2 + $0x2c] sm:$0xf] %vm339, %v318
      %352 = vst.msk [vmem:[#allocation2 + $0x30] sm:$0xf] %vm339, %v319
      %353 = vst.msk [vmem:[#allocation2 + $0x34] sm:$0xf] %vm339, %v320
      %354 = vst.msk [vmem:[#allocation2 + $0x38] sm:$0xf] %vm339, %v321
      %355 = vst.msk [vmem:[#allocation2 + $0x3c] sm:$0xf] %vm339, %v322
      %356 = vst.msk [vmem:[#allocation2 + $0x40] sm:$0xf] %vm339, %v323
      %357 = vst.msk [vmem:[#allocation2 + $0x44] sm:$0xf] %vm339, %v324
      %358 = vst.msk [vmem:[#allocation2 + $0x48] sm:$0xf] %vm339, %v325
      %359 = vst.msk [vmem:[#allocation2 + $0x4c] sm:$0xf] %vm339, %v326
      %360 = vst.msk [vmem:[#allocation2 + $0x50] sm:$0xf] %vm339, %v327
      %361 = vst.msk [vmem:[#allocation2 + $0x54] sm:$0xf] %vm339, %v328
      %362 = vst.msk [vmem:[#allocation2 + $0x58] sm:$0xf] %vm339, %v329
      %363 = vst.msk [vmem:[#allocation2 + $0x5c] sm:$0xf] %vm339, %v330
      %364 = vst.msk [vmem:[#allocation2 + $0x60] sm:$0xf] %vm339, %v331
      %365 = vst.msk [vmem:[#allocation2 + $0x64] sm:$0xf] %vm339, %v332
      %366 = vst.msk [vmem:[#allocation2 + $0x68] sm:$0xf] %vm339, %v333
      %367 = vst.msk [vmem:[#allocation2 + $0x6c] sm:$0xf] %vm339, %v334
      %368 = vst.msk [vmem:[#allocation2 + $0x70] sm:$0xf] %vm339, %v335
      %369 = vst.msk [vmem:[#allocation2 + $0x74] sm:$0xf] %vm339, %v336
      %370 = vst.msk [vmem:[#allocation2 + $0x78] sm:$0xf] %vm339, %v337
      %371 = vst.msk [vmem:[#allocation2 + $0x7c] sm:$0xf] %vm339, %v338
    $region37: #{tpu_custom_call.1} parent=1 // pred_fallthru
      _
    %v372 = vld [vmem:[%s0] sm:$0xf]
    %v373 = vld [vmem:[%s0 + $0x4] sm:$0xf]
    %v374 = vld [vmem:[%s4] sm:$0xf]
    %v375 = vld [vmem:[%s4 + $0x4] sm:$0xf]
    %v376 = vld [vmem:[%s4 + $0x8] sm:$0xf]
    %v377 = vld [vmem:[%s4 + $0xc] sm:$0xf]
    %v378 = vld [vmem:[%s5] sm:$0x1]
    %v380 = vperm.slane %v378, 0
    %v384 = vunpack.c.l.b16 %v372
    %v385 = vunpack.c.l.b16 %v373
    %v386 = vpack.c.b16 %v385, %v384
    %v391 = vunpack.c.l.b16 %v374
    %v392 = vunpack.c.l.b16 %v375
    %v393 = vunpack.c.l.b16 %v376
    %v394 = vunpack.c.l.b16 %v377
    %v395 = vpack.c.b16 %v392, %v391
    %v396 = vpack.c.b16 %v394, %v393
    %vm399 = vcmask 261120
    %v401 = vsel %vm399, %v386, 0
    %403 = vmatpush.bf16.msra.mxu0 0
    %404 = vmatpush.bf16.msra.mxu0 0
    %405 = vmatpush.bf16.msra.mxu0 0
    %406 = vmatpush.bf16.msra.mxu0 0
    %407 = vmatpush.bf16.msra.mxu0 0
    %408 = vmatpush.bf16.msra.mxu0 0
    %409 = vmatpush.bf16.msra.mxu0 %v396
    %410 = vmatpush.bf16.msra.mxu0 %v395
    %411 = vmatmul.bf16.gmra.mxu0 %v401
    %v412 = vpop.f32.mrf.mxu0
    %v413 = vadd.f32 %v380, %v412
    %v414 = vpop.f32.mrf.mxu0
    %v415 = vadd.f32 %v380, %v414
    %416 = vdwg.mxu0
    %v417 = vpack.c.bf16 %v413, %v413
    %v418 = vpack.c.bf16 %v415, %v415
    %v419 = vld [vmem:[#allocation2] sm:$0xf]
    %v420 = vld [vmem:[#allocation2 + $0x4] sm:$0xf]
    %v421 = vld [vmem:[#allocation2 + $0x8] sm:$0xf]
    %v422 = vld [vmem:[#allocation2 + $0xc] sm:$0xf]
    %v423 = vld [vmem:[#allocation2 + $0x10] sm:$0xf]
    %v424 = vld [vmem:[#allocation2 + $0x14] sm:$0xf]
    %v425 = vld [vmem:[#allocation2 + $0x18] sm:$0xf]
    %v426 = vld [vmem:[#allocation2 + $0x1c] sm:$0xf]
    %v427 = vld [vmem:[#allocation2 + $0x20] sm:$0xf]
    %v428 = vld [vmem:[#allocation2 + $0x24] sm:$0xf]
    %v429 = vld [vmem:[#allocation2 + $0x28] sm:$0xf]
    %v430 = vld [vmem:[#allocation2 + $0x2c] sm:$0xf]
    %v431 = vld [vmem:[#allocation2 + $0x30] sm:$0xf]
    %v432 = vld [vmem:[#allocation2 + $0x34] sm:$0xf]
    %v433 = vld [vmem:[#allocation2 + $0x38] sm:$0xf]
    %v434 = vld [vmem:[#allocation2 + $0x3c] sm:$0xf]
    %v435 = vld [vmem:[%s3] sm:$0x1]
    %v436 = vld [vmem:[%s2] sm:$0xff]
    %v437 = vmul.f32 %v436, 0.03125
    %v439 = vperm.slane %v435, 0
    %v457 = vunpack.c.l.b16 %v419
    %v458 = vunpack.c.l.b16 %v420
    %v459 = vunpack.c.l.b16 %v421
    %v460 = vunpack.c.l.b16 %v422
    %v461 = vunpack.c.l.b16 %v423
    %v462 = vunpack.c.l.b16 %v424
    %v463 = vunpack.c.l.b16 %v425
    %v464 = vunpack.c.l.b16 %v426
    %v465 = vunpack.c.l.b16 %v427
    %v466 = vunpack.c.l.b16 %v428
    %v467 = vunpack.c.l.b16 %v429
    %v468 = vunpack.c.l.b16 %v430
    %v469 = vunpack.c.l.b16 %v431
    %v470 = vunpack.c.l.b16 %v432
    %v471 = vunpack.c.l.b16 %v433
    %v472 = vunpack.c.l.b16 %v434
    %v473 = vpack.c.b16 %v458, %v457
    %v474 = vpack.c.b16 %v460, %v459
    %v475 = vpack.c.b16 %v462, %v461
    %v476 = vpack.c.b16 %v464, %v463
    %v477 = vpack.c.b16 %v466, %v465
    %v478 = vpack.c.b16 %v468, %v467
    %v479 = vpack.c.b16 %v470, %v469
    %v480 = vpack.c.b16 %v472, %v471
    %vm481 = vcmask 64512
    %v483 = vsel %vm481, %v417, 0
    %v486 = vsel %vm481, %v473, 0
    %v489 = vsel %vm481, %v474, 0
    %v492 = vsel %vm481, %v475, 0
    %v495 = vsel %vm481, %v476, 0
    %v498 = vsel %vm481, %v477, 0
    %v501 = vsel %vm481, %v478, 0
    %v504 = vsel %vm481, %v479, 0
    %v507 = vsel %vm481, %v480, 0
    %509 = vmatpush.bf16.xpose.msra.mxu0 %v507
    %510 = vmatpush.bf16.xpose.msra.mxu0 %v504
    %511 = vmatpush.bf16.xpose.msra.mxu0 %v501
    %512 = vmatpush.bf16.xpose.msra.mxu0 %v498
    %513 = vmatpush.bf16.xpose.msra.mxu0 %v495
    %514 = vmatpush.bf16.xpose.msra.mxu0 %v492
    %515 = vmatpush.bf16.xpose.msra.mxu0 %v489
    %516 = vmatpush.bf16.xpose.msra.mxu0 %v486
    %517 = vmatmul.bf16.gmra.mxu0 %v483
    %v518 = vpop.f32.mrf.mxu0
    %v519 = vadd.f32 %v439, %v518
    %v520 = vpop.f32.mrf.mxu0
    %521 = vdwg.mxu0
    %522 = vmax.xlane.f32.xlu0 %v519
    %v523 = vpop.xlane.xlu0 %522
    %v524 = vsub.f32 %v519, %v523
    %v525 = vmul.f32 %v524, 1.442695
    %v526 = vpow.pop %v525
    %527 = vadd.xlane.f32.xlu0 %v526
    %v528 = vpop.xlane.xlu0 %527
    %v529 = vrcp.pop %v528
    %v530 = vmul.f32 %v528, %v529
    %v531 = vsub.f32 1.0, %v530
    %v532 = vmul.f32 %v529, %v531
    %v533 = vadd.f32 %v529, %v532
    %vm534 = vweird.f32 %v528
    %vm535 = vweird.f32 %v529
    %vm536 = vmor %vm534, %vm535
    %v537 = vsel %vm536, %v529, %v533
    %v538 = vand.u32 2147483647, %v528
    %vm539 = vcmp.eq.f32.partialorder %v538, 8.507059e+37
    %v540 = vand.u32 %v528, 2147483648
    %v541 = vor.u32 1.1754944e-38, %v540
    %v542 = vsel %vm539, %v541, %v537
    %v543 = vmul.f32 %v437, %v542
    %545 = vset.pattern.permute.xlu0 0
    %546 = vperm.xlu0 %545, %v543
    %v547 = vpop.permute.xlu0 %546
    %v549 = vmul.f32 %v526, %v547
    %v550 = vrot.slane %v549, 4
    %v551 = vadd.f32 %v549, %v550
    %v552 = vrot.slane %v551, 2
    %v553 = vadd.f32 %v551, %v552
    %v554 = vrot.slane %v553, 1
    %v555 = vadd.f32 %v553, %v554
    %v556 = vadd.f32 %v555, 0.0
    %v558 = vunpack.c.l.b16 %v417
    %v559 = vpack.c.b16 %v558, %v558
    %560 = vrot.lane.b32.xlu0 %v559, 120
    %v561 = vpop.permute.xlu0 %560
    %562 = vrot.lane.b32.xlu0 %v473, 120
    %v563 = vpop.permute.xlu0 %562
    %564 = vrot.lane.b32.xlu0 %v474, 120
    %v565 = vpop.permute.xlu0 %564
    %566 = vrot.lane.b32.xlu0 %v475, 120
    %v567 = vpop.permute.xlu0 %566
    %568 = vrot.lane.b32.xlu0 %v476, 120
    %v569 = vpop.permute.xlu0 %568
    %570 = vrot.lane.b32.xlu0 %v477, 120
    %v571 = vpop.permute.xlu0 %570
    %572 = vrot.lane.b32.xlu0 %v478, 120
    %v573 = vpop.permute.xlu0 %572
    %574 = vrot.lane.b32.xlu0 %v479, 120
    %v575 = vpop.permute.xlu0 %574
    %576 = vrot.lane.b32.xlu0 %v480, 120
    %v577 = vpop.permute.xlu0 %576
    %v579 = vsel %vm481, %v561, 0
    %v582 = vsel %vm481, %v563, 0
    %v585 = vsel %vm481, %v565, 0
    %v588 = vsel %vm481, %v567, 0
    %v591 = vsel %vm481, %v569, 0
    %v594 = vsel %vm481, %v571, 0
    %v597 = vsel %vm481, %v573, 0
    %v600 = vsel %vm481, %v575, 0
    %v603 = vsel %vm481, %v577, 0
    %605 = vmatpush.bf16.xpose.msra.mxu0 %v603
    %606 = vmatpush.bf16.xpose.msra.mxu0 %v600
    %607 = vmatpush.bf16.xpose.msra.mxu0 %v597
    %608 = vmatpush.bf16.xpose.msra.mxu0 %v594
    %609 = vmatpush.bf16.xpose.msra.mxu0 %v591
    %610 = vmatpush.bf16.xpose.msra.mxu0 %v588
    %611 = vmatpush.bf16.xpose.msra.mxu0 %v585
    %612 = vmatpush.bf16.xpose.msra.mxu0 %v582
    %613 = vmatmul.bf16.gmra.mxu0 %v579
    %v614 = vpop.f32.mrf.mxu0
    %v615 = vadd.f32 %v439, %v614
    %v616 = vpop.f32.mrf.mxu0
    %617 = vdwg.mxu0
    %618 = vmax.xlane.f32.xlu0 %v615
    %v619 = vpop.xlane.xlu0 %618
    %v620 = vsub.f32 %v615, %v619
    %v621 = vmul.f32 %v620, 1.442695
    %v622 = vpow.pop %v621
    %623 = vadd.xlane.f32.xlu0 %v622
    %v624 = vpop.xlane.xlu0 %623
    %v625 = vrcp.pop %v624
    %v626 = vmul.f32 %v624, %v625
    %v627 = vsub.f32 1.0, %v626
    %v628 = vmul.f32 %v625, %v627
    %v629 = vadd.f32 %v625, %v628
    %vm630 = vweird.f32 %v624
    %vm631 = vweird.f32 %v625
    %vm632 = vmor %vm630, %vm631
    %v633 = vsel %vm632, %v625, %v629
    %v634 = vand.u32 2147483647, %v624
    %vm635 = vcmp.eq.f32.partialorder %v634, 8.507059e+37
    %v636 = vand.u32 %v624, 2147483648
    %v637 = vor.u32 1.1754944e-38, %v636
    %v638 = vsel %vm635, %v637, %v633
    %v639 = vmul.f32 %v437, %v638
    %641 = vset.pattern.permute.xlu0 0
    %642 = vperm.xlu0 %641, %v639
    %v643 = vpop.permute.xlu0 %642
    %v645 = vmul.f32 %v622, %v643
    %v646 = vrot.slane %v645, 4
    %v647 = vadd.f32 %v645, %v646
    %v648 = vrot.slane %v647, 2
    %v649 = vadd.f32 %v647, %v648
    %v650 = vrot.slane %v649, 1
    %v651 = vadd.f32 %v649, %v650
    %v652 = vadd.f32 %v556, %v651
    %653 = vrot.lane.b32.xlu0 %v559, 112
    %v654 = vpop.permute.xlu0 %653
    %655 = vrot.lane.b32.xlu0 %v473, 112
    %v656 = vpop.permute.xlu0 %655
    %657 = vrot.lane.b32.xlu0 %v474, 112
    %v658 = vpop.permute.xlu0 %657
    %659 = vrot.lane.b32.xlu0 %v475, 112
    %v660 = vpop.permute.xlu0 %659
    %661 = vrot.lane.b32.xlu0 %v476, 112
    %v662 = vpop.permute.xlu0 %661
    %663 = vrot.lane.b32.xlu0 %v477, 112
    %v664 = vpop.permute.xlu0 %663
    %665 = vrot.lane.b32.xlu0 %v478, 112
    %v666 = vpop.permute.xlu0 %665
    %667 = vrot.lane.b32.xlu0 %v479, 112
    %v668 = vpop.permute.xlu0 %667
    %669 = vrot.lane.b32.xlu0 %v480, 112
    %v670 = vpop.permute.xlu0 %669
    %v672 = vsel %vm481, %v654, 0
    %v675 = vsel %vm481, %v656, 0
    %v678 = vsel %vm481, %v658, 0
    %v681 = vsel %vm481, %v660, 0
    %v684 = vsel %vm481, %v662, 0
    %v687 = vsel %vm481, %v664, 0
    %v690 = vsel %vm481, %v666, 0
    %v693 = vsel %vm481, %v668, 0
    %v696 = vsel %vm481, %v670, 0
    %698 = vmatpush.bf16.xpose.msra.mxu0 %v696
    %699 = vmatpush.bf16.xpose.msra.mxu0 %v693
    %700 = vmatpush.bf16.xpose.msra.mxu0 %v690
    %701 = vmatpush.bf16.xpose.msra.mxu0 %v687
    %702 = vmatpush.bf16.xpose.msra.mxu0 %v684
    %703 = vmatpush.bf16.xpose.msra.mxu0 %v681
    %704 = vmatpush.bf16.xpose.msra.mxu0 %v678
    %705 = vmatpush.bf16.xpose.msra.mxu0 %v675
    %706 = vmatmul.bf16.gmra.mxu0 %v672
    %v707 = vpop.f32.mrf.mxu0
    %v708 = vadd.f32 %v439, %v707
    %v709 = vpop.f32.mrf.mxu0
    %710 = vdwg.mxu0
    %711 = vmax.xlane.f32.xlu0 %v708
    %v712 = vpop.xlane.xlu0 %711
    %v713 = vsub.f32 %v708, %v712
    %v714 = vmul.f32 %v713, 1.442695
    %v715 = vpow.pop %v714
    %716 = vadd.xlane.f32.xlu0 %v715
    %v717 = vpop.xlane.xlu0 %716
    %v718 = vrcp.pop %v717
    %v719 = vmul.f32 %v717, %v718
    %v720 = vsub.f32 1.0, %v719
    %v721 = vmul.f32 %v718, %v720
    %v722 = vadd.f32 %v718, %v721
    %vm723 = vweird.f32 %v717
    %vm724 = vweird.f32 %v718
    %vm725 = vmor %vm723, %vm724
    %v726 = vsel %vm725, %v718, %v722
    %v727 = vand.u32 2147483647, %v717
    %vm728 = vcmp.eq.f32.partialorder %v727, 8.507059e+37
    %v729 = vand.u32 %v717, 2147483648
    %v730 = vor.u32 1.1754944e-38, %v729
    %v731 = vsel %vm728, %v730, %v726
    %v732 = vmul.f32 %v437, %v731
    %734 = vset.pattern.permute.xlu0 0
    %735 = vperm.xlu0 %734, %v732
    %v736 = vpop.permute.xlu0 %735
    %v738 = vmul.f32 %v715, %v736
    %v739 = vrot.slane %v738, 4
    %v740 = vadd.f32 %v738, %v739
    %v741 = vrot.slane %v740, 2
    %v742 = vadd.f32 %v740, %v741
    %v743 = vrot.slane %v742, 1
    %v744 = vadd.f32 %v742, %v743
    %v745 = vadd.f32 %v652, %v744
    %746 = vrot.lane.b32.xlu0 %v559, 104
    %v747 = vpop.permute.xlu0 %746
    %748 = vrot.lane.b32.xlu0 %v473, 104
    %v749 = vpop.permute.xlu0 %748
    %750 = vrot.lane.b32.xlu0 %v474, 104
    %v751 = vpop.permute.xlu0 %750
    %752 = vrot.lane.b32.xlu0 %v475, 104
    %v753 = vpop.permute.xlu0 %752
    %754 = vrot.lane.b32.xlu0 %v476, 104
    %v755 = vpop.permute.xlu0 %754
    %756 = vrot.lane.b32.xlu0 %v477, 104
    %v757 = vpop.permute.xlu0 %756
    %758 = vrot.lane.b32.xlu0 %v478, 104
    %v759 = vpop.permute.xlu0 %758
    %760 = vrot.lane.b32.xlu0 %v479, 104
    %v761 = vpop.permute.xlu0 %760
    %762 = vrot.lane.b32.xlu0 %v480, 104
    %v763 = vpop.permute.xlu0 %762
    %v765 = vsel %vm481, %v747, 0
    %v768 = vsel %vm481, %v749, 0
    %v771 = vsel %vm481, %v751, 0
    %v774 = vsel %vm481, %v753, 0
    %v777 = vsel %vm481, %v755, 0
    %v780 = vsel %vm481, %v757, 0
    %v783 = vsel %vm481, %v759, 0
    %v786 = vsel %vm481, %v761, 0
    %v789 = vsel %vm481, %v763, 0
    %791 = vmatpush.bf16.xpose.msra.mxu0 %v789
    %792 = vmatpush.bf16.xpose.msra.mxu0 %v786
    %793 = vmatpush.bf16.xpose.msra.mxu0 %v783
    %794 = vmatpush.bf16.xpose.msra.mxu0 %v780
    %795 = vmatpush.bf16.xpose.msra.mxu0 %v777
    %796 = vmatpush.bf16.xpose.msra.mxu0 %v774
    %797 = vmatpush.bf16.xpose.msra.mxu0 %v771
    %798 = vmatpush.bf16.xpose.msra.mxu0 %v768
    %799 = vmatmul.bf16.gmra.mxu0 %v765
    %v800 = vpop.f32.mrf.mxu0
    %v801 = vadd.f32 %v439, %v800
    %v802 = vpop.f32.mrf.mxu0
    %803 = vdwg.mxu0
    %804 = vmax.xlane.f32.xlu0 %v801
    %v805 = vpop.xlane.xlu0 %804
    %v806 = vsub.f32 %v801, %v805
    %v807 = vmul.f32 %v806, 1.442695
    %v808 = vpow.pop %v807
    %809 = vadd.xlane.f32.xlu0 %v808
    %v810 = vpop.xlane.xlu0 %809
    %v811 = vrcp.pop %v810
    %v812 = vmul.f32 %v810, %v811
    %v813 = vsub.f32 1.0, %v812
    %v814 = vmul.f32 %v811, %v813
    %v815 = vadd.f32 %v811, %v814
    %vm816 = vweird.f32 %v810
    %vm817 = vweird.f32 %v811
    %vm818 = vmor %vm816, %vm817
    %v819 = vsel %vm818, %v811, %v815
    %v820 = vand.u32 2147483647, %v810
    %vm821 = vcmp.eq.f32.partialorder %v820, 8.507059e+37
    %v822 = vand.u32 %v810, 2147483648
    %v823 = vor.u32 1.1754944e-38, %v822
    %v824 = vsel %vm821, %v823, %v819
    %v825 = vmul.f32 %v437, %v824
    %827 = vset.pattern.permute.xlu0 0
    %828 = vperm.xlu0 %827, %v825
    %v829 = vpop.permute.xlu0 %828
    %v831 = vmul.f32 %v808, %v829
    %v832 = vrot.slane %v831, 4
    %v833 = vadd.f32 %v831, %v832
    %v834 = vrot.slane %v833, 2
    %v835 = vadd.f32 %v833, %v834
    %v836 = vrot.slane %v835, 1
    %v837 = vadd.f32 %v835, %v836
    %v838 = vadd.f32 %v745, %v837
    %v839 = vld [vmem:[#allocation3] sm:$0x1]
    %v840 = vadd.f32 %v839, %v838
    %841 = vst [vmem:[#allocation3] sm:$0x1] %v840
    %s842 = scalar_lea.vmem [#allocation2], 64
    %v843 = vld [vmem:[%s842] sm:$0xf]
    %v844 = vld [vmem:[%s842 + $0x4] sm:$0xf]
    %v845 = vld [vmem:[%s842 + $0x8] sm:$0xf]
    %v846 = vld [vmem:[%s842 + $0xc] sm:$0xf]
    %v847 = vld [vmem:[%s842 + $0x10] sm:$0xf]
    %v848 = vld [vmem:[%s842 + $0x14] sm:$0xf]
    %v849 = vld [vmem:[%s842 + $0x18] sm:$0xf]
    %v850 = vld [vmem:[%s842 + $0x1c] sm:$0xf]
    %v851 = vld [vmem:[%s842 + $0x20] sm:$0xf]
    %v852 = vld [vmem:[%s842 + $0x24] sm:$0xf]
    %v853 = vld [vmem:[%s842 + $0x28] sm:$0xf]
    %v854 = vld [vmem:[%s842 + $0x2c] sm:$0xf]
    %v855 = vld [vmem:[%s842 + $0x30] sm:$0xf]
    %v856 = vld [vmem:[%s842 + $0x34] sm:$0xf]
    %v857 = vld [vmem:[%s842 + $0x38] sm:$0xf]
    %v858 = vld [vmem:[%s842 + $0x3c] sm:$0xf]
    %s859 = scalar_lea.vmem %s3, 1
    %v860 = vld [vmem:[%s859] sm:$0x1]
    %s861 = scalar_lea.vmem %s2, 8
    %v862 = vld [vmem:[%s861] sm:$0xff]
    %v863 = vmul.f32 %v862, 0.03125
    %v865 = vperm.slane %v860, 0
    %v883 = vunpack.c.l.b16 %v843
    %v884 = vunpack.c.l.b16 %v844
    %v885 = vunpack.c.l.b16 %v845
    %v886 = vunpack.c.l.b16 %v846
    %v887 = vunpack.c.l.b16 %v847
    %v888 = vunpack.c.l.b16 %v848
    %v889 = vunpack.c.l.b16 %v849
    %v890 = vunpack.c.l.b16 %v850
    %v891 = vunpack.c.l.b16 %v851
    %v892 = vunpack.c.l.b16 %v852
    %v893 = vunpack.c.l.b16 %v853
    %v894 = vunpack.c.l.b16 %v854
    %v895 = vunpack.c.l.b16 %v855
    %v896 = vunpack.c.l.b16 %v856
    %v897 = vunpack.c.l.b16 %v857
    %v898 = vunpack.c.l.b16 %v858
    %v899 = vpack.c.b16 %v884, %v883
    %v900 = vpack.c.b16 %v886, %v885
    %v901 = vpack.c.b16 %v888, %v887
    %v902 = vpack.c.b16 %v890, %v889
    %v903 = vpack.c.b16 %v892, %v891
    %v904 = vpack.c.b16 %v894, %v893
    %v905 = vpack.c.b16 %v896, %v895
    %v906 = vpack.c.b16 %v898, %v897
    %v908 = vsel %vm481, %v418, 0
    %v911 = vsel %vm481, %v899, 0
    %v914 = vsel %vm481, %v900, 0
    %v917 = vsel %vm481, %v901, 0
    %v920 = vsel %vm481, %v902, 0
    %v923 = vsel %vm481, %v903, 0
    %v926 = vsel %vm481, %v904, 0
    %v929 = vsel %vm481, %v905, 0
    %v932 = vsel %vm481, %v906, 0
    %934 = vmatpush.bf16.xpose.msra.mxu0 %v932
    %935 = vmatpush.bf16.xpose.msra.mxu0 %v929
    %936 = vmatpush.bf16.xpose.msra.mxu0 %v926
    %937 = vmatpush.bf16.xpose.msra.mxu0 %v923
    %938 = vmatpush.bf16.xpose.msra.mxu0 %v920
    %939 = vmatpush.bf16.xpose.msra.mxu0 %v917
    %940 = vmatpush.bf16.xpose.msra.mxu0 %v914
    %941 = vmatpush.bf16.xpose.msra.mxu0 %v911
    %942 = vmatmul.bf16.gmra.mxu0 %v908
    %v943 = vpop.f32.mrf.mxu0
    %v944 = vadd.f32 %v865, %v943
    %v945 = vpop.f32.mrf.mxu0
    %946 = vdwg.mxu0
    %947 = vmax.xlane.f32.xlu0 %v944
    %v948 = vpop.xlane.xlu0 %947
    %v949 = vsub.f32 %v944, %v948
    %v950 = vmul.f32 %v949, 1.442695
    %v951 = vpow.pop %v950
    %952 = vadd.xlane.f32.xlu0 %v951
    %v953 = vpop.xlane.xlu0 %952
    %v954 = vrcp.pop %v953
    %v955 = vmul.f32 %v953, %v954
    %v956 = vsub.f32 1.0, %v955
    %v957 = vmul.f32 %v954, %v956
    %v958 = vadd.f32 %v954, %v957
    %vm959 = vweird.f32 %v953
    %vm960 = vweird.f32 %v954
    %vm961 = vmor %vm959, %vm960
    %v962 = vsel %vm961, %v954, %v958
    %v963 = vand.u32 2147483647, %v953
    %vm964 = vcmp.eq.f32.partialorder %v963, 8.507059e+37
    %v965 = vand.u32 %v953, 2147483648
    %v966 = vor.u32 1.1754944e-38, %v965
    %v967 = vsel %vm964, %v966, %v962
    %v968 = vmul.f32 %v863, %v967
    %970 = vset.pattern.permute.xlu0 0
    %971 = vperm.xlu0 %970, %v968
    %v972 = vpop.permute.xlu0 %971
    %v974 = vmul.f32 %v951, %v972
    %v975 = vrot.slane %v974, 4
    %v976 = vadd.f32 %v974, %v975
    %v977 = vrot.slane %v976, 2
    %v978 = vadd.f32 %v976, %v977
    %v979 = vrot.slane %v978, 1
    %v980 = vadd.f32 %v978, %v979
    %v981 = vadd.f32 %v980, 0.0
    %v983 = vunpack.c.l.b16 %v418
    %v984 = vpack.c.b16 %v983, %v983
    %985 = vrot.lane.b32.xlu0 %v984, 120
    %v986 = vpop.permute.xlu0 %985
    %987 = vrot.lane.b32.xlu0 %v899, 120
    %v988 = vpop.permute.xlu0 %987
    %989 = vrot.lane.b32.xlu0 %v900, 120
    %v990 = vpop.permute.xlu0 %989
    %991 = vrot.lane.b32.xlu0 %v901, 120
    %v992 = vpop.permute.xlu0 %991
    %993 = vrot.lane.b32.xlu0 %v902, 120
    %v994 = vpop.permute.xlu0 %993
    %995 = vrot.lane.b32.xlu0 %v903, 120
    %v996 = vpop.permute.xlu0 %995
    %997 = vrot.lane.b32.xlu0 %v904, 120
    %v998 = vpop.permute.xlu0 %997
    %999 = vrot.lane.b32.xlu0 %v905, 120
    %v1000 = vpop.permute.xlu0 %999
    %1001 = vrot.lane.b32.xlu0 %v906, 120
    %v1002 = vpop.permute.xlu0 %1001
    %v1004 = vsel %vm481, %v986, 0
    %v1007 = vsel %vm481, %v988, 0
    %v1010 = vsel %vm481, %v990, 0
    %v1013 = vsel %vm481, %v992, 0
    %v1016 = vsel %vm481, %v994, 0
    %v1019 = vsel %vm481, %v996, 0
    %v1022 = vsel %vm481, %v998, 0
    %v1025 = vsel %vm481, %v1000, 0
    %v1028 = vsel %vm481, %v1002, 0
    %1030 = vmatpush.bf16.xpose.msra.mxu0 %v1028
    %1031 = vmatpush.bf16.xpose.msra.mxu0 %v1025
    %1032 = vmatpush.bf16.xpose.msra.mxu0 %v1022
    %1033 = vmatpush.bf16.xpose.msra.mxu0 %v1019
    %1034 = vmatpush.bf16.xpose.msra.mxu0 %v1016
    %1035 = vmatpush.bf16.xpose.msra.mxu0 %v1013
    %1036 = vmatpush.bf16.xpose.msra.mxu0 %v1010
    %1037 = vmatpush.bf16.xpose.msra.mxu0 %v1007
    %1038 = vmatmul.bf16.gmra.mxu0 %v1004
    %v1039 = vpop.f32.mrf.mxu0
    %v1040 = vadd.f32 %v865, %v1039
    %v1041 = vpop.f32.mrf.mxu0
    %1042 = vdwg.mxu0
    %1043 = vmax.xlane.f32.xlu0 %v1040
    %v1044 = vpop.xlane.xlu0 %1043
    %v1045 = vsub.f32 %v1040, %v1044
    %v1046 = vmul.f32 %v1045, 1.442695
    %v1047 = vpow.pop %v1046
    %1048 = vadd.xlane.f32.xlu0 %v1047
    %v1049 = vpop.xlane.xlu0 %1048
    %v1050 = vrcp.pop %v1049
    %v1051 = vmul.f32 %v1049, %v1050
    %v1052 = vsub.f32 1.0, %v1051
    %v1053 = vmul.f32 %v1050, %v1052
    %v1054 = vadd.f32 %v1050, %v1053
    %vm1055 = vweird.f32 %v1049
    %vm1056 = vweird.f32 %v1050
    %vm1057 = vmor %vm1055, %vm1056
    %v1058 = vsel %vm1057, %v1050, %v1054
    %v1059 = vand.u32 2147483647, %v1049
    %vm1060 = vcmp.eq.f32.partialorder %v1059, 8.507059e+37
    %v1061 = vand.u32 %v1049, 2147483648
    %v1062 = vor.u32 1.1754944e-38, %v1061
    %v1063 = vsel %vm1060, %v1062, %v1058
    %v1064 = vmul.f32 %v863, %v1063
    %1066 = vset.pattern.permute.xlu0 0
    %1067 = vperm.xlu0 %1066, %v1064
    %v1068 = vpop.permute.xlu0 %1067
    %v1070 = vmul.f32 %v1047, %v1068
    %v1071 = vrot.slane %v1070, 4
    %v1072 = vadd.f32 %v1070, %v1071
    %v1073 = vrot.slane %v1072, 2
    %v1074 = vadd.f32 %v1072, %v1073
    %v1075 = vrot.slane %v1074, 1
    %v1076 = vadd.f32 %v1074, %v1075
    %v1077 = vadd.f32 %v981, %v1076
    %1078 = vrot.lane.b32.xlu0 %v984, 112
    %v1079 = vpop.permute.xlu0 %1078
    %1080 = vrot.lane.b32.xlu0 %v899, 112
    %v1081 = vpop.permute.xlu0 %1080
    %1082 = vrot.lane.b32.xlu0 %v900, 112
    %v1083 = vpop.permute.xlu0 %1082
    %1084 = vrot.lane.b32.xlu0 %v901, 112
    %v1085 = vpop.permute.xlu0 %1084
    %1086 = vrot.lane.b32.xlu0 %v902, 112
    %v1087 = vpop.permute.xlu0 %1086
    %1088 = vrot.lane.b32.xlu0 %v903, 112
    %v1089 = vpop.permute.xlu0 %1088
    %1090 = vrot.lane.b32.xlu0 %v904, 112
    %v1091 = vpop.permute.xlu0 %1090
    %1092 = vrot.lane.b32.xlu0 %v905, 112
    %v1093 = vpop.permute.xlu0 %1092
    %1094 = vrot.lane.b32.xlu0 %v906, 112
    %v1095 = vpop.permute.xlu0 %1094
    %v1097 = vsel %vm481, %v1079, 0
    %v1100 = vsel %vm481, %v1081, 0
    %v1103 = vsel %vm481, %v1083, 0
    %v1106 = vsel %vm481, %v1085, 0
    %v1109 = vsel %vm481, %v1087, 0
    %v1112 = vsel %vm481, %v1089, 0
    %v1115 = vsel %vm481, %v1091, 0
    %v1118 = vsel %vm481, %v1093, 0
    %v1121 = vsel %vm481, %v1095, 0
    %1123 = vmatpush.bf16.xpose.msra.mxu0 %v1121
    %1124 = vmatpush.bf16.xpose.msra.mxu0 %v1118
    %1125 = vmatpush.bf16.xpose.msra.mxu0 %v1115
    %1126 = vmatpush.bf16.xpose.msra.mxu0 %v1112
    %1127 = vmatpush.bf16.xpose.msra.mxu0 %v1109
    %1128 = vmatpush.bf16.xpose.msra.mxu0 %v1106
    %1129 = vmatpush.bf16.xpose.msra.mxu0 %v1103
    %1130 = vmatpush.bf16.xpose.msra.mxu0 %v1100
    %1131 = vmatmul.bf16.gmra.mxu0 %v1097
    %v1132 = vpop.f32.mrf.mxu0
    %v1133 = vadd.f32 %v865, %v1132
    %v1134 = vpop.f32.mrf.mxu0
    %1135 = vdwg.mxu0
    %1136 = vmax.xlane.f32.xlu0 %v1133
    %v1137 = vpop.xlane.xlu0 %1136
    %v1138 = vsub.f32 %v1133, %v1137
    %v1139 = vmul.f32 %v1138, 1.442695
    %v1140 = vpow.pop %v1139
    %1141 = vadd.xlane.f32.xlu0 %v1140
    %v1142 = vpop.xlane.xlu0 %1141
    %v1143 = vrcp.pop %v1142
    %v1144 = vmul.f32 %v1142, %v1143
    %v1145 = vsub.f32 1.0, %v1144
    %v1146 = vmul.f32 %v1143, %v1145
    %v1147 = vadd.f32 %v1143, %v1146
    %vm1148 = vweird.f32 %v1142
    %vm1149 = vweird.f32 %v1143
    %vm1150 = vmor %vm1148, %vm1149
    %v1151 = vsel %vm1150, %v1143, %v1147
    %v1152 = vand.u32 2147483647, %v1142
    %vm1153 = vcmp.eq.f32.partialorder %v1152, 8.507059e+37
    %v1154 = vand.u32 %v1142, 2147483648
    %v1155 = vor.u32 1.1754944e-38, %v1154
    %v1156 = vsel %vm1153, %v1155, %v1151
    %v1157 = vmul.f32 %v863, %v1156
    %1159 = vset.pattern.permute.xlu0 0
    %1160 = vperm.xlu0 %1159, %v1157
    %v1161 = vpop.permute.xlu0 %1160
    %v1163 = vmul.f32 %v1140, %v1161
    %v1164 = vrot.slane %v1163, 4
    %v1165 = vadd.f32 %v1163, %v1164
    %v1166 = vrot.slane %v1165, 2
    %v1167 = vadd.f32 %v1165, %v1166
    %v1168 = vrot.slane %v1167, 1
    %v1169 = vadd.f32 %v1167, %v1168
    %v1170 = vadd.f32 %v1077, %v1169
    %1171 = vrot.lane.b32.xlu0 %v984, 104
    %v1172 = vpop.permute.xlu0 %1171
    %1173 = vrot.lane.b32.xlu0 %v899, 104
    %v1174 = vpop.permute.xlu0 %1173
    %1175 = vrot.lane.b32.xlu0 %v900, 104
    %v1176 = vpop.permute.xlu0 %1175
    %1177 = vrot.lane.b32.xlu0 %v901, 104
    %v1178 = vpop.permute.xlu0 %1177
    %1179 = vrot.lane.b32.xlu0 %v902, 104
    %v1180 = vpop.permute.xlu0 %1179
    %1181 = vrot.lane.b32.xlu0 %v903, 104
    %v1182 = vpop.permute.xlu0 %1181
    %1183 = vrot.lane.b32.xlu0 %v904, 104
    %v1184 = vpop.permute.xlu0 %1183
    %1185 = vrot.lane.b32.xlu0 %v905, 104
    %v1186 = vpop.permute.xlu0 %1185
    %1187 = vrot.lane.b32.xlu0 %v906, 104
    %v1188 = vpop.permute.xlu0 %1187
    %v1190 = vsel %vm481, %v1172, 0
    %v1193 = vsel %vm481, %v1174, 0
    %v1196 = vsel %vm481, %v1176, 0
    %v1199 = vsel %vm481, %v1178, 0
    %v1202 = vsel %vm481, %v1180, 0
    %v1205 = vsel %vm481, %v1182, 0
    %v1208 = vsel %vm481, %v1184, 0
    %v1211 = vsel %vm481, %v1186, 0
    %v1214 = vsel %vm481, %v1188, 0
    %1216 = vmatpush.bf16.xpose.msra.mxu0 %v1214
    %1217 = vmatpush.bf16.xpose.msra.mxu0 %v1211
    %1218 = vmatpush.bf16.xpose.msra.mxu0 %v1208
    %1219 = vmatpush.bf16.xpose.msra.mxu0 %v1205
    %1220 = vmatpush.bf16.xpose.msra.mxu0 %v1202
    %1221 = vmatpush.bf16.xpose.msra.mxu0 %v1199
    %1222 = vmatpush.bf16.xpose.msra.mxu0 %v1196
    %1223 = vmatpush.bf16.xpose.msra.mxu0 %v1193
    %1224 = vmatmul.bf16.gmra.mxu0 %v1190
    %v1225 = vpop.f32.mrf.mxu0
    %v1226 = vadd.f32 %v865, %v1225
    %v1227 = vpop.f32.mrf.mxu0
    %1228 = vdwg.mxu0
    %1229 = vmax.xlane.f32.xlu0 %v1226
    %v1230 = vpop.xlane.xlu0 %1229
    %v1231 = vsub.f32 %v1226, %v1230
    %v1232 = vmul.f32 %v1231, 1.442695
    %v1233 = vpow.pop %v1232
    %1234 = vadd.xlane.f32.xlu0 %v1233
    %v1235 = vpop.xlane.xlu0 %1234
    %v1236 = vrcp.pop %v1235
    %v1237 = vmul.f32 %v1235, %v1236
    %v1238 = vsub.f32 1.0, %v1237
    %v1239 = vmul.f32 %v1236, %v1238
    %v1240 = vadd.f32 %v1236, %v1239
    %vm1241 = vweird.f32 %v1235
    %vm1242 = vweird.f32 %v1236
    %vm1243 = vmor %vm1241, %vm1242
    %v1244 = vsel %vm1243, %v1236, %v1240
    %v1245 = vand.u32 2147483647, %v1235
    %vm1246 = vcmp.eq.f32.partialorder %v1245, 8.507059e+37
    %v1247 = vand.u32 %v1235, 2147483648
    %v1248 = vor.u32 1.1754944e-38, %v1247
    %v1249 = vsel %vm1246, %v1248, %v1244
    %v1250 = vmul.f32 %v863, %v1249
    %1252 = vset.pattern.permute.xlu0 0
    %1253 = vperm.xlu0 %1252, %v1250
    %v1254 = vpop.permute.xlu0 %1253
    %v1256 = vmul.f32 %v1233, %v1254
    %v1257 = vrot.slane %v1256, 4
    %v1258 = vadd.f32 %v1256, %v1257
    %v1259 = vrot.slane %v1258, 2
    %v1260 = vadd.f32 %v1258, %v1259
    %v1261 = vrot.slane %v1260, 1
    %v1262 = vadd.f32 %v1260, %v1261
    %v1263 = vadd.f32 %v1170, %v1262
    %s1264 = scalar_lea.vmem [#allocation3], 1
    %v1265 = vld [vmem:[%s1264] sm:$0x1]
    %v1266 = vadd.f32 %v1265, %v1263
    %1267 = vst [vmem:[%s1264] sm:$0x1] %v1266
    // Predicated region
    $region38: #{tpu_custom_call.1} parent=1 // pred_check
      _
    $region39: #{tpu_custom_call.1} parent=1 // pred_check_branch
      %1269 = sbr.rel (0) target = $region41
    $region40: #{tpu_custom_call.1} parent=1 // pred_region
      %1271 = vsyncadd [#allocation4], 0
      %s1272 = sshll.u32 [#allocation3], 4
      %s1273 = int_to_ptr.vmem [resolvable:$true] %s1272
      %s1274 = sshll.u32 %s8, 4
      %s1275 = int_to_ptr.hbm [resolvable:$true] %s1274
      %1280 = dma.vmem_to_hbm [thread:$0]  %s1273, 32, %s1275, [#allocation4], 16, 16, 1
    $region41: #{tpu_custom_call.1} parent=1 // pred_fallthru
      _
    // Predicated region
    $region42: #{tpu_custom_call.1} parent=1 // pred_check
      _
    $region43: #{tpu_custom_call.1} parent=1 // pred_check_branch
      %1282 = sbr.rel (0) target = $region45
    $region44: #{tpu_custom_call.1} parent=1 // pred_region
      %1284 = dma.done [#allocation4], 32
    $region45: #{tpu_custom_call.1} parent=1 // pred_fallthru
      _
    %1285 = vsyncpa [#allocation4], 1

</llo_original>
